<compile_context>
chip_gen: v7x
topology: tpu7x:2x2x1
jax: 0.10.0
libtpu: 0.0.40
codegen_flags: <defaults>
</compile_context>

<pallas_src>
import functools

import jax
import jax.numpy as jnp
from jax import lax
from jax.experimental import pallas as pl
from jax.experimental.pallas import tpu as pltpu

_BANDWIDTHS = (0.2, 0.5, 0.9, 1.3)   # 'multiscale' branch of the reference module


def _round_up(v, m):
    return (v + m - 1) // m * m


def _mmd_block_kernel(n, tile, need_mask,
                      xr_ref, yr_ref, xc_ref, yc_ref,
                      nxr_ref, nyr_ref, nxc_ref, nyc_ref,
                      out_ref):
    i = pl.program_id(0)
    j = pl.program_id(1)

    # Output block (1,1,1) stays resident across the column (reduction) axis.
    @pl.when(j == 0)
    def _init():
        out_ref[...] = jnp.zeros_like(out_ref)

    xr = xr_ref[...]          # (T, Dp) rows of x
    yr = yr_ref[...]          # (T, Dp) rows of y
    xc = xc_ref[...]          # (T, Dp) cols of x
    yc = yc_ref[...]          # (T, Dp) cols of y

    # Gram blocks without explicit transposes (contract dim 1 against dim 1).
    # Fuse the x.y^T and y.y^T blocks into one MXU call via a row concat.
    dn = (((1,), (1,)), ((), ()))
    g_xx = lax.dot_general(xr, xc, dn, preferred_element_type=jnp.float32)  # (T, T)
    r = jnp.concatenate([xr, yr], axis=0)                                   # (2T, Dp)
    g_ry = lax.dot_general(r, yc, dn, preferred_element_type=jnp.float32)   # (2T, T)
    g_xy = g_ry[:tile, :]     # x_i . y_j
    g_yy = g_ry[tile:, :]     # y_i . y_j

    nxr = nxr_ref[...]        # (T, 1)  ||x_i||^2 for the row tile
    nyr = nyr_ref[...]        # (T, 1)  ||y_i||^2 for the row tile
    nxc = nxc_ref[...]        # (1, T)  ||x_j||^2 for the col tile
    nyc = nyc_ref[...]        # (1, T)  ||y_j||^2 for the col tile

    d_xx = nxr + nxc - 2.0 * g_xx
    d_yy = nyr + nyc - 2.0 * g_yy
    d_xy = nxr + nyc - 2.0 * g_xy

    # Multiscale inverse-quadratic kernels, combined into one (T,T) accumulator
    # so a single block reduction suffices.
    t = jnp.zeros_like(g_xx)
    for a in _BANDWIDTHS:
        a2 = float(a * a)
        t = t + a2 / (a2 + d_xx) + a2 / (a2 + d_yy) - 2.0 * (a2 / (a2 + d_xy))

    if need_mask:  # static: only when n was padded up to the tile size
        row_ids = lax.broadcasted_iota(jnp.int32, t.shape, 0) + i * tile
        col_ids = lax.broadcasted_iota(jnp.int32, t.shape, 1) + j * tile
        valid = (row_ids < n) & (col_ids < n)
        t = jnp.where(valid, t, 0.0)

    out_ref[...] += jnp.sum(t)


def mmd_multiscale_loss(x, y, z_var=None, *, tile=256):
    """Pallas port of MaximumMeanDiscrepancyLoss2.forward (kernel='multiscale').

    `z_var` is accepted for API parity but — exactly like the PyTorch module's
    multiscale branch — it is not used.
    """
    del z_var
    assert x.ndim == 2 and x.shape == y.shape, (x.shape, y.shape)
    n, d = x.shape
    x = x.astype(jnp.float32)
    y = y.astype(jnp.float32)

    t_blk = min(tile, _round_up(max(n, 1), 128))   # lane-dense Gram tiles
    n_pad = _round_up(n, t_blk)
    d_pad = _round_up(d, 128)

    if n_pad != n or d_pad != d:
        x_p = jnp.pad(x, ((0, n_pad - n), (0, d_pad - d)))
        y_p = jnp.pad(y, ((0, n_pad - n), (0, d_pad - d)))
    else:
        x_p, y_p = x, y

    # Hoisted squared row norms (== diag of the Gram matrices), computed once.
    nx = jnp.sum(x_p * x_p, axis=1, keepdims=True)    # (n_pad, 1)
    ny = jnp.sum(y_p * y_p, axis=1, keepdims=True)    # (n_pad, 1)
    nx_t = nx.reshape(1, n_pad)                        # (1, n_pad)
    ny_t = ny.reshape(1, n_pad)

    grid = (n_pad // t_blk, n_pad // t_blk)
    kernel = functools.partial(_mmd_block_kernel, n, t_blk, n_pad != n)

    partials = pl.pallas_call(
        kernel,
        out_shape=jax.ShapeDtypeStruct((grid[0], 1, 1), jnp.float32),
        grid_spec=pltpu.PrefetchScalarGridSpec(
            num_scalar_prefetch=0,
            grid=grid,
            in_specs=[
                pl.BlockSpec((t_blk, d_pad), lambda i, j: (i, 0)),  # x row tile
                pl.BlockSpec((t_blk, d_pad), lambda i, j: (i, 0)),  # y row tile
                pl.BlockSpec((t_blk, d_pad), lambda i, j: (j, 0)),  # x col tile
                pl.BlockSpec((t_blk, d_pad), lambda i, j: (j, 0)),  # y col tile
                pl.BlockSpec((t_blk, 1), lambda i, j: (i, 0)),      # ||x||^2 (rows)
                pl.BlockSpec((t_blk, 1), lambda i, j: (i, 0)),      # ||y||^2 (rows)
                pl.BlockSpec((1, t_blk), lambda i, j: (0, j)),      # ||x||^2 (cols)
                pl.BlockSpec((1, t_blk), lambda i, j: (0, j)),      # ||y||^2 (cols)
            ],
            out_specs=pl.BlockSpec((1, 1, 1), lambda i, j: (i, 0, 0)),
        ),
        compiler_params=pltpu.CompilerParams(
            dimension_semantics=("parallel", "arbitrary"),
            vmem_limit_bytes=32 * 1024 * 1024,
        ),
    )(x_p, y_p, x_p, y_p, nx, ny, nx_t, ny_t)

    return jnp.sum(partials) / jnp.float32(n * n)


def _mmd_reference(x, y):
    """Pure-JAX mirror of the PyTorch module (multiscale branch)."""
    xx = x @ x.T
    yy = y @ y.T
    zz = x @ y.T
    rx = jnp.broadcast_to(jnp.diag(xx)[None, :], xx.shape)
    ry = jnp.broadcast_to(jnp.diag(yy)[None, :], yy.shape)
    dxx = rx.T + rx - 2.0 * xx
    dyy = ry.T + ry - 2.0 * yy
    dxy = rx.T + ry - 2.0 * zz
    XX = jnp.zeros_like(xx)
    YY = jnp.zeros_like(xx)
    XY = jnp.zeros_like(xx)
    for a in _BANDWIDTHS:
        XX = XX + a ** 2 * (a ** 2 + dxx) ** (-1)
        YY = YY + a ** 2 * (a ** 2 + dyy) ** (-1)
        XY = XY + a ** 2 * (a ** 2 + dxy) ** (-1)
    return jnp.mean(XX + YY - 2.0 * XY)


if __name__ == "__main__":
    key = jax.random.PRNGKey(0)
    k1, k2 = jax.random.split(key)
    n, d = 8, 32
    x = jax.random.normal(k1, (n, d), dtype=jnp.float32)
    y = jax.random.normal(k2, (n, d), dtype=jnp.float32)
    z_var = 2.0   # accepted but unused by the 'multiscale' branch, as in the module

    loss = mmd_multiscale_loss(x, y, z_var)
    jax.block_until_ready(loss)

    ref = _mmd_reference(x, y)
    assert jnp.allclose(loss, ref, rtol=1e-4, atol=1e-5), (loss, ref)

    print("KERNEL_OK")
</pallas_src>

<mosaic_0001>
module attributes {stable_mosaic.version = 11 : i64} {
  func.func @_mmd_block_kernel(%arg0: i32, %arg1: i32, %arg2: memref<128x128xf32, #tpu.memory_space<vmem>>, %arg3: memref<128x128xf32, #tpu.memory_space<vmem>>, %arg4: memref<128x128xf32, #tpu.memory_space<vmem>>, %arg5: memref<128x128xf32, #tpu.memory_space<vmem>>, %arg6: memref<128x1xf32, #tpu.memory_space<vmem>>, %arg7: memref<128x1xf32, #tpu.memory_space<vmem>>, %arg8: memref<1x128xf32, #tpu.memory_space<vmem>>, %arg9: memref<1x128xf32, #tpu.memory_space<vmem>>, %arg10: memref<1x1x1xf32, #tpu.memory_space<vmem>>) attributes {dimension_semantics = [#tpu.dimension_semantics<parallel>, #tpu.dimension_semantics<arbitrary>], iteration_bounds = array<i64: 1, 1>, scalar_prefetch = 0 : i64, scratch_operands = 0 : i64, tpu.core_type = #tpu.core_type<tc>, window_params = [{transform_indices = @transform_0, window_bounds = array<i64: 128, 128>}, {transform_indices = @transform_1, window_bounds = array<i64: 128, 128>}, {transform_indices = @transform_2, window_bounds = array<i64: 128, 128>}, {transform_indices = @transform_3, window_bounds = array<i64: 128, 128>}, {transform_indices = @transform_4, window_bounds = array<i64: 128, 1>}, {transform_indices = @transform_5, window_bounds = array<i64: 128, 1>}, {transform_indices = @transform_6, window_bounds = array<i64: 1, 128>}, {transform_indices = @transform_7, window_bounds = array<i64: 1, 128>}, {transform_indices = @transform_8, window_bounds = array<i64: 1, 1, 1>}]} {
    %c0_i32 = arith.constant 0 : i32
    %0 = arith.cmpi eq, %arg1, %c0_i32 : i32
    %1 = arith.extui %0 : i1 to i32
    %c0_i32_0 = arith.constant 0 : i32
    %2 = arith.cmpi ne, %1, %c0_i32_0 : i32
    scf.if %2 {
      %cst_59 = arith.constant 0.000000e+00 : f32
      %126 = vector.broadcast %cst_59 : f32 to vector<1x1x1xf32>
      %c0_60 = arith.constant 0 : index
      %c0_61 = arith.constant 0 : index
      %c0_62 = arith.constant 0 : index
      %127 = vector.load %arg10[%c0_60, %c0_61, %c0_62] : memref<1x1x1xf32, #tpu.memory_space<vmem>>, vector<1x1x1xf32>
      tpu.vector_store %arg10[%c0_60, %c0_61, %c0_62], %126 {strides = array<i32>} : memref<1x1x1xf32, #tpu.memory_space<vmem>>, vector<1x1x1xf32>,
    } else {
    }
    %c0 = arith.constant 0 : index
    %c0_1 = arith.constant 0 : index
    %3 = vector.load %arg2[%c0, %c0_1] : memref<128x128xf32, #tpu.memory_space<vmem>>, vector<128x128xf32>
    %c0_2 = arith.constant 0 : index
    %c0_3 = arith.constant 0 : index
    %4 = vector.load %arg3[%c0_2, %c0_3] : memref<128x128xf32, #tpu.memory_space<vmem>>, vector<128x128xf32>
    %c0_4 = arith.constant 0 : index
    %c0_5 = arith.constant 0 : index
    %5 = vector.load %arg4[%c0_4, %c0_5] : memref<128x128xf32, #tpu.memory_space<vmem>>, vector<128x128xf32>
    %c0_6 = arith.constant 0 : index
    %c0_7 = arith.constant 0 : index
    %6 = vector.load %arg5[%c0_6, %c0_7] : memref<128x128xf32, #tpu.memory_space<vmem>>, vector<128x128xf32>
    %cst = arith.constant dense<0.000000e+00> : vector<128x128xf32>
    %7 = tpu.matmul %3, %5, %cst {dimension_numbers = #tpu.dot_dimension_numbers<[1], [1], [0], [0], [0, 0, 1, 0], [], []>} : vector<128x128xf32>, vector<128x128xf32>, vector<128x128xf32> -> vector<128x128xf32>
    %8 = tpu.concatenate %3, %4 in 0 : vector<128x128xf32>, vector<128x128xf32> -> vector<256x128xf32>
    %cst_8 = arith.constant dense<0.000000e+00> : vector<256x128xf32>
    %9 = tpu.matmul %8, %6, %cst_8 {dimension_numbers = #tpu.dot_dimension_numbers<[1], [1], [0], [0], [0, 0, 1, 0], [], []>} : vector<256x128xf32>, vector<128x128xf32>, vector<256x128xf32> -> vector<256x128xf32>
    %10 = vector.extract_strided_slice %9 {offsets = [0, 0], sizes = [128, 128], strides = [1, 1]} : vector<256x128xf32> to vector<128x128xf32>
    %11 = vector.extract_strided_slice %9 {offsets = [128, 0], sizes = [128, 128], strides = [1, 1]} : vector<256x128xf32> to vector<128x128xf32>
    %c0_9 = arith.constant 0 : index
    %c0_10 = arith.constant 0 : index
    %12 = vector.load %arg6[%c0_9, %c0_10] : memref<128x1xf32, #tpu.memory_space<vmem>>, vector<128x1xf32>
    %c0_11 = arith.constant 0 : index
    %c0_12 = arith.constant 0 : index
    %13 = vector.load %arg7[%c0_11, %c0_12] : memref<128x1xf32, #tpu.memory_space<vmem>>, vector<128x1xf32>
    %c0_13 = arith.constant 0 : index
    %c0_14 = arith.constant 0 : index
    %14 = vector.load %arg8[%c0_13, %c0_14] : memref<1x128xf32, #tpu.memory_space<vmem>>, vector<1x128xf32>
    %c0_15 = arith.constant 0 : index
    %c0_16 = arith.constant 0 : index
    %15 = vector.load %arg9[%c0_15, %c0_16] : memref<1x128xf32, #tpu.memory_space<vmem>>, vector<1x128xf32>
    %16 = vector.broadcast %12 : vector<128x1xf32> to vector<128x128xf32>
    %17 = vector.broadcast %14 : vector<1x128xf32> to vector<128x128xf32>
    %18 = arith.addf %16, %17 : vector<128x128xf32>
    %cst_17 = arith.constant 2.000000e+00 : f32
    %19 = vector.broadcast %cst_17 : f32 to vector<128x128xf32>
    %20 = arith.mulf %19, %7 : vector<128x128xf32>
    %21 = arith.subf %18, %20 : vector<128x128xf32>
    %22 = vector.broadcast %13 : vector<128x1xf32> to vector<128x128xf32>
    %23 = vector.broadcast %15 : vector<1x128xf32> to vector<128x128xf32>
    %24 = arith.addf %22, %23 : vector<128x128xf32>
    %cst_18 = arith.constant 2.000000e+00 : f32
    %25 = vector.broadcast %cst_18 : f32 to vector<128x128xf32>
    %26 = arith.mulf %25, %11 : vector<128x128xf32>
    %27 = arith.subf %24, %26 : vector<128x128xf32>
    %28 = vector.broadcast %12 : vector<128x1xf32> to vector<128x128xf32>
    %29 = vector.broadcast %15 : vector<1x128xf32> to vector<128x128xf32>
    %30 = arith.addf %28, %29 : vector<128x128xf32>
    %cst_19 = arith.constant 2.000000e+00 : f32
    %31 = vector.broadcast %cst_19 : f32 to vector<128x128xf32>
    %32 = arith.mulf %31, %10 : vector<128x128xf32>
    %33 = arith.subf %30, %32 : vector<128x128xf32>
    %cst_20 = arith.constant 0.000000e+00 : f32
    %34 = vector.broadcast %cst_20 : f32 to vector<128x128xf32>
    %cst_21 = arith.constant 4.000000e-02 : f32
    %35 = vector.broadcast %cst_21 : f32 to vector<128x128xf32>
    %36 = arith.addf %35, %21 : vector<128x128xf32>
    %cst_22 = arith.constant 4.000000e-02 : f32
    %37 = vector.broadcast %cst_22 : f32 to vector<128x128xf32>
    %38 = arith.divf %37, %36 : vector<128x128xf32>
    %39 = arith.addf %34, %38 : vector<128x128xf32>
    %cst_23 = arith.constant 4.000000e-02 : f32
    %40 = vector.broadcast %cst_23 : f32 to vector<128x128xf32>
    %41 = arith.addf %40, %27 : vector<128x128xf32>
    %cst_24 = arith.constant 4.000000e-02 : f32
    %42 = vector.broadcast %cst_24 : f32 to vector<128x128xf32>
    %43 = arith.divf %42, %41 : vector<128x128xf32>
    %44 = arith.addf %39, %43 : vector<128x128xf32>
    %cst_25 = arith.constant 4.000000e-02 : f32
    %45 = vector.broadcast %cst_25 : f32 to vector<128x128xf32>
    %46 = arith.addf %45, %33 : vector<128x128xf32>
    %cst_26 = arith.constant 4.000000e-02 : f32
    %47 = vector.broadcast %cst_26 : f32 to vector<128x128xf32>
    %48 = arith.divf %47, %46 : vector<128x128xf32>
    %cst_27 = arith.constant 2.000000e+00 : f32
    %49 = vector.broadcast %cst_27 : f32 to vector<128x128xf32>
    %50 = arith.mulf %49, %48 : vector<128x128xf32>
    %51 = arith.subf %44, %50 : vector<128x128xf32>
    %cst_28 = arith.constant 2.500000e-01 : f32
    %52 = vector.broadcast %cst_28 : f32 to vector<128x128xf32>
    %53 = arith.addf %52, %21 : vector<128x128xf32>
    %cst_29 = arith.constant 2.500000e-01 : f32
    %54 = vector.broadcast %cst_29 : f32 to vector<128x128xf32>
    %55 = arith.divf %54, %53 : vector<128x128xf32>
    %56 = arith.addf %51, %55 : vector<128x128xf32>
    %cst_30 = arith.constant 2.500000e-01 : f32
    %57 = vector.broadcast %cst_30 : f32 to vector<128x128xf32>
    %58 = arith.addf %57, %27 : vector<128x128xf32>
    %cst_31 = arith.constant 2.500000e-01 : f32
    %59 = vector.broadcast %cst_31 : f32 to vector<128x128xf32>
    %60 = arith.divf %59, %58 : vector<128x128xf32>
    %61 = arith.addf %56, %60 : vector<128x128xf32>
    %cst_32 = arith.constant 2.500000e-01 : f32
    %62 = vector.broadcast %cst_32 : f32 to vector<128x128xf32>
    %63 = arith.addf %62, %33 : vector<128x128xf32>
    %cst_33 = arith.constant 2.500000e-01 : f32
    %64 = vector.broadcast %cst_33 : f32 to vector<128x128xf32>
    %65 = arith.divf %64, %63 : vector<128x128xf32>
    %cst_34 = arith.constant 2.000000e+00 : f32
    %66 = vector.broadcast %cst_34 : f32 to vector<128x128xf32>
    %67 = arith.mulf %66, %65 : vector<128x128xf32>
    %68 = arith.subf %61, %67 : vector<128x128xf32>
    %cst_35 = arith.constant 8.100000e-01 : f32
    %69 = vector.broadcast %cst_35 : f32 to vector<128x128xf32>
    %70 = arith.addf %69, %21 : vector<128x128xf32>
    %cst_36 = arith.constant 8.100000e-01 : f32
    %71 = vector.broadcast %cst_36 : f32 to vector<128x128xf32>
    %72 = arith.divf %71, %70 : vector<128x128xf32>
    %73 = arith.addf %68, %72 : vector<128x128xf32>
    %cst_37 = arith.constant 8.100000e-01 : f32
    %74 = vector.broadcast %cst_37 : f32 to vector<128x128xf32>
    %75 = arith.addf %74, %27 : vector<128x128xf32>
    %cst_38 = arith.constant 8.100000e-01 : f32
    %76 = vector.broadcast %cst_38 : f32 to vector<128x128xf32>
    %77 = arith.divf %76, %75 : vector<128x128xf32>
    %78 = arith.addf %73, %77 : vector<128x128xf32>
    %cst_39 = arith.constant 8.100000e-01 : f32
    %79 = vector.broadcast %cst_39 : f32 to vector<128x128xf32>
    %80 = arith.addf %79, %33 : vector<128x128xf32>
    %cst_40 = arith.constant 8.100000e-01 : f32
    %81 = vector.broadcast %cst_40 : f32 to vector<128x128xf32>
    %82 = arith.divf %81, %80 : vector<128x128xf32>
    %cst_41 = arith.constant 2.000000e+00 : f32
    %83 = vector.broadcast %cst_41 : f32 to vector<128x128xf32>
    %84 = arith.mulf %83, %82 : vector<128x128xf32>
    %85 = arith.subf %78, %84 : vector<128x128xf32>
    %cst_42 = arith.constant 1.690000e+00 : f32
    %86 = vector.broadcast %cst_42 : f32 to vector<128x128xf32>
    %87 = arith.addf %86, %21 : vector<128x128xf32>
    %cst_43 = arith.constant 1.690000e+00 : f32
    %88 = vector.broadcast %cst_43 : f32 to vector<128x128xf32>
    %89 = arith.divf %88, %87 : vector<128x128xf32>
    %90 = arith.addf %85, %89 : vector<128x128xf32>
    %cst_44 = arith.constant 1.690000e+00 : f32
    %91 = vector.broadcast %cst_44 : f32 to vector<128x128xf32>
    %92 = arith.addf %91, %27 : vector<128x128xf32>
    %cst_45 = arith.constant 1.690000e+00 : f32
    %93 = vector.broadcast %cst_45 : f32 to vector<128x128xf32>
    %94 = arith.divf %93, %92 : vector<128x128xf32>
    %95 = arith.addf %90, %94 : vector<128x128xf32>
    %cst_46 = arith.constant 1.690000e+00 : f32
    %96 = vector.broadcast %cst_46 : f32 to vector<128x128xf32>
    %97 = arith.addf %96, %33 : vector<128x128xf32>
    %cst_47 = arith.constant 1.690000e+00 : f32
    %98 = vector.broadcast %cst_47 : f32 to vector<128x128xf32>
    %99 = arith.divf %98, %97 : vector<128x128xf32>
    %cst_48 = arith.constant 2.000000e+00 : f32
    %100 = vector.broadcast %cst_48 : f32 to vector<128x128xf32>
    %101 = arith.mulf %100, %99 : vector<128x128xf32>
    %102 = arith.subf %95, %101 : vector<128x128xf32>
    %103 = tpu.iota {dimensions = array<i32: 0>} : vector<128x128xi32>
    %c128_i32 = arith.constant 128 : i32
    %104 = arith.muli %arg0, %c128_i32 : i32
    %105 = vector.broadcast %104 : i32 to vector<128x128xi32>
    %106 = arith.addi %103, %105 : vector<128x128xi32>
    %107 = tpu.iota {dimensions = array<i32: 1>} : vector<128x128xi32>
    %c128_i32_49 = arith.constant 128 : i32
    %108 = arith.muli %arg1, %c128_i32_49 : i32
    %109 = vector.broadcast %108 : i32 to vector<128x128xi32>
    %110 = arith.addi %107, %109 : vector<128x128xi32>
    %c8_i32 = arith.constant 8 : i32
    %111 = vector.broadcast %c8_i32 : i32 to vector<128x128xi32>
    %112 = arith.cmpi slt, %106, %111 : vector<128x128xi32>
    %c8_i32_50 = arith.constant 8 : i32
    %113 = vector.broadcast %c8_i32_50 : i32 to vector<128x128xi32>
    %114 = arith.cmpi slt, %110, %113 : vector<128x128xi32>
    %115 = arith.andi %112, %114 : vector<128x128xi1>
    %cst_51 = arith.constant 0.000000e+00 : f32
    %116 = vector.broadcast %cst_51 : f32 to vector<128x128xf32>
    %117 = arith.select %115, %102, %116 : vector<128x128xi1>, vector<128x128xf32>
    %c0_52 = arith.constant 0 : index
    %c0_53 = arith.constant 0 : index
    %c0_54 = arith.constant 0 : index
    %118 = vector.load %arg10[%c0_52, %c0_53, %c0_54] : memref<1x1x1xf32, #tpu.memory_space<vmem>>, vector<1x1x1xf32>
    %119 = vector.shape_cast %117 : vector<128x128xf32> to vector<1x128x128xf32>
    %cst_55 = arith.constant dense<0.000000e+00> : vector<1xf32>
    %120 = vector.multi_reduction <add>, %119, %cst_55 [1, 2] : vector<1x128x128xf32> to vector<1xf32>
    %121 = vector.shape_cast %120 : vector<1xf32> to vector<1x1x1xf32>
    %122 = vector.extract %121[0, 0, 0] : f32 from vector<1x1x1xf32>
    %123 = vector.broadcast %122 : f32 to vector<1x1x1xf32>
    %124 = arith.addf %118, %123 : vector<1x1x1xf32>
    %c0_56 = arith.constant 0 : index
    %c0_57 = arith.constant 0 : index
    %c0_58 = arith.constant 0 : index
    %125 = vector.load %arg10[%c0_56, %c0_57, %c0_58] : memref<1x1x1xf32, #tpu.memory_space<vmem>>, vector<1x1x1xf32>
    tpu.vector_store %arg10[%c0_56, %c0_57, %c0_58], %124 {strides = array<i32>} : memref<1x1x1xf32, #tpu.memory_space<vmem>>, vector<1x1x1xf32>,
    return
  }
  func.func @transform_0(%arg0: i32, %arg1: i32) -> (i32, i32) {
    %c0_i32 = arith.constant 0 : i32
    %c0_i32_0 = arith.constant 0 : i32
    return %arg0, %c0_i32 : i32, i32
  }
  func.func @transform_1(%arg0: i32, %arg1: i32) -> (i32, i32) {
    %c0_i32 = arith.constant 0 : i32
    %c0_i32_0 = arith.constant 0 : i32
    return %arg0, %c0_i32 : i32, i32
  }
  func.func @transform_2(%arg0: i32, %arg1: i32) -> (i32, i32) {
    %c0_i32 = arith.constant 0 : i32
    %c0_i32_0 = arith.constant 0 : i32
    return %arg1, %c0_i32 : i32, i32
  }
  func.func @transform_3(%arg0: i32, %arg1: i32) -> (i32, i32) {
    %c0_i32 = arith.constant 0 : i32
    %c0_i32_0 = arith.constant 0 : i32
    return %arg1, %c0_i32 : i32, i32
  }
  func.func @transform_4(%arg0: i32, %arg1: i32) -> (i32, i32) {
    %c0_i32 = arith.constant 0 : i32
    %c0_i32_0 = arith.constant 0 : i32
    return %arg0, %c0_i32 : i32, i32
  }
  func.func @transform_5(%arg0: i32, %arg1: i32) -> (i32, i32) {
    %c0_i32 = arith.constant 0 : i32
    %c0_i32_0 = arith.constant 0 : i32
    return %arg0, %c0_i32 : i32, i32
  }
  func.func @transform_6(%arg0: i32, %arg1: i32) -> (i32, i32) {
    %c0_i32 = arith.constant 0 : i32
    %c0_i32_0 = arith.constant 0 : i32
    return %c0_i32, %arg1 : i32, i32
  }
  func.func @transform_7(%arg0: i32, %arg1: i32) -> (i32, i32) {
    %c0_i32 = arith.constant 0 : i32
    %c0_i32_0 = arith.constant 0 : i32
    return %c0_i32, %arg1 : i32, i32
  }
  func.func @transform_8(%arg0: i32, %arg1: i32) -> (i32, i32, i32) {
    %c0_i32 = arith.constant 0 : i32
    %c0_i32_0 = arith.constant 0 : i32
    %c0_i32_1 = arith.constant 0 : i32
    return %arg0, %c0_i32, %c0_i32_0 : i32, i32, i32
  }
}

</mosaic_0001>

<llo_original>
// kernel: tpu_custom_call.1
$region0: #{tpu_custom_call.1}
  #allocation0 [shape = 'u32[]', space=smem, size = 0x4, offset = 0x4, fixed_abs, tag = 'smem constant byte address 0x4 - core index']
  #allocation1 [shape = 'u32[144,128]{1,0:T(1,128)}', space=vmem, size = 0x12000, scoped, tag = 'internal scratch']
  %s0 = inlined_call_operand.vmem [shape: f32[128,128], index: 0, kind: input, shape index: {}]
  %s1 = inlined_call_operand.vmem [shape: f32[128,128], index: 1, kind: input, shape index: {}]
  %s2 = inlined_call_operand.hbm [shape: f32[128,128], index: 2, kind: input, shape index: {}]
  %s3 = inlined_call_operand.hbm [shape: f32[128,128], index: 3, kind: input, shape index: {}]
  %s4 = inlined_call_operand.vmem [shape: f32[128,1], index: 4, kind: input, shape index: {}]
  %s5 = inlined_call_operand.vmem [shape: f32[128,1], index: 5, kind: input, shape index: {}]
  %s6 = inlined_call_operand.vmem [shape: f32[1,128], index: 6, kind: input, shape index: {}]
  %s7 = inlined_call_operand.vmem [shape: f32[1,128], index: 7, kind: input, shape index: {}]
  %s8 = inlined_call_operand.hbm [shape: f32[1,1,1], index: 8, kind: output, shape index: {}]
  %s9 = sld [smem:[#allocation0]]
  $region54: #{tpu_custom_call.1} parent=0
    _
  %s11 = ssub.s32 1, %s9
  %s12 = scalar_select 0, %s11, %s9
  $region1: #{tpu_custom_call.1} parent=0
    #allocation2 [shape = 'u8[65536]{0}', space=vmem, size = 0x10000, scoped, tag = 'input window, operand 2, single buffered']
    #allocation3 [shape = 's32[1]{0}', space=sflag, size = 0x4, scoped, tag = 'scoped memory for tpu_custom_call.1']
    #allocation4 [shape = 's32[1]{0}', space=sflag, size = 0x4, scoped, tag = 'scoped memory for tpu_custom_call.1']
    #allocation5 [shape = 'u8[65536]{0}', space=vmem, size = 0x10000, scoped, tag = 'input window, operand 3, single buffered']
    #allocation6 [shape = 's32[1]{0}', space=sflag, size = 0x4, scoped, tag = 'scoped memory for tpu_custom_call.1']
    #allocation7 [shape = 'u8[512]{0}', space=vmem, size = 0x400, scoped, tag = 'output window, operand 0, single buffered']
    %13 = vsyncpa [#allocation3], 0
    %14 = vsyncpa [#allocation6], 0
    %15 = vsyncpa [#allocation4], 0
    // Predicated region
    $region2: #{tpu_custom_call.1} parent=1 // pred_check
      _
    $region3: #{tpu_custom_call.1} parent=1 // pred_check_branch
      %17 = sbr.rel (0) target = $region5
    $region4: #{tpu_custom_call.1} parent=1 // pred_region
      _
    $region5: #{tpu_custom_call.1} parent=1 // pred_fallthru
      _
    // Predicated region
    $region6: #{tpu_custom_call.1} parent=1 // pred_check
      _
    $region7: #{tpu_custom_call.1} parent=1 // pred_check_branch
      %19 = sbr.rel (0) target = $region9
    $region8: #{tpu_custom_call.1} parent=1 // pred_region
      _
    $region9: #{tpu_custom_call.1} parent=1 // pred_fallthru
      _
    // Predicated region
    $region10: #{tpu_custom_call.1} parent=1 // pred_check
      _
    $region11: #{tpu_custom_call.1} parent=1 // pred_check_branch
      %21 = sbr.rel (0) target = $region13
    $region12: #{tpu_custom_call.1} parent=1 // pred_region
      %s23 = ssub.s32 2048, 2048
      %24 = vsyncadd [#allocation3], %s23
      %s25 = sshll.u32 [#allocation2], 4
      %s26 = int_to_ptr.vmem [resolvable:$true] %s25
      %31 = dma.hbm_to_vmem [thread:$0]  %s2, 2048, %s26, [#allocation3], 128, 128, 8
    $region13: #{tpu_custom_call.1} parent=1 // pred_fallthru
      _
    // Predicated region
    $region14: #{tpu_custom_call.1} parent=1 // pred_check
      _
    $region15: #{tpu_custom_call.1} parent=1 // pred_check_branch
      %33 = sbr.rel (0) target = $region17
    $region16: #{tpu_custom_call.1} parent=1 // pred_region
      %s35 = ssub.s32 2048, 2048
      %36 = vsyncadd [#allocation6], %s35
      %s37 = sshll.u32 [#allocation5], 4
      %s38 = int_to_ptr.vmem [resolvable:$true] %s37
      %43 = dma.hbm_to_vmem [thread:$0]  %s3, 2048, %s38, [#allocation6], 128, 128, 8
    $region17: #{tpu_custom_call.1} parent=1 // pred_fallthru
      _
    // Predicated region
    $region18: #{tpu_custom_call.1} parent=1 // pred_check
      _
    $region19: #{tpu_custom_call.1} parent=1 // pred_check_branch
      %45 = sbr.rel (0) target = $region21
    $region20: #{tpu_custom_call.1} parent=1 // pred_region
      _
    $region21: #{tpu_custom_call.1} parent=1 // pred_fallthru
      _
    // Predicated region
    $region22: #{tpu_custom_call.1} parent=1 // pred_check
      _
    $region23: #{tpu_custom_call.1} parent=1 // pred_check_branch
      %47 = sbr.rel (0) target = $region25
    $region24: #{tpu_custom_call.1} parent=1 // pred_region
      _
    $region25: #{tpu_custom_call.1} parent=1 // pred_fallthru
      _
    // Predicated region
    $region26: #{tpu_custom_call.1} parent=1 // pred_check
      _
    $region27: #{tpu_custom_call.1} parent=1 // pred_check_branch
      %49 = sbr.rel (0) target = $region29
    $region28: #{tpu_custom_call.1} parent=1 // pred_region
      _
    $region29: #{tpu_custom_call.1} parent=1 // pred_fallthru
      _
    // Predicated region
    $region30: #{tpu_custom_call.1} parent=1 // pred_check
      _
    $region31: #{tpu_custom_call.1} parent=1 // pred_check_branch
      %51 = sbr.rel (0) target = $region33
    $region32: #{tpu_custom_call.1} parent=1 // pred_region
      _
    $region33: #{tpu_custom_call.1} parent=1 // pred_fallthru
      _
    // Predicated region
    $region34: #{tpu_custom_call.1} parent=1 // pred_check
      _
    $region35: #{tpu_custom_call.1} parent=1 // pred_check_branch
      %53 = sbr.rel (0) target = $region37
    $region36: #{tpu_custom_call.1} parent=1 // pred_region
      %54 = dma.done [#allocation3], 2048
    $region37: #{tpu_custom_call.1} parent=1 // pred_fallthru
      _
    // Predicated region
    $region38: #{tpu_custom_call.1} parent=1 // pred_check
      _
    $region39: #{tpu_custom_call.1} parent=1 // pred_check_branch
      %56 = sbr.rel (0) target = $region41
    $region40: #{tpu_custom_call.1} parent=1 // pred_region
      %57 = dma.done [#allocation6], 2048
    $region41: #{tpu_custom_call.1} parent=1 // pred_fallthru
      _
    %p58 = scmp.eq.s32.totalorder 0, 0
    // Predicated region
    $region42: #{tpu_custom_call.1} parent=1 // pred_check
      %p59 = pneg %p58
    $region43: #{tpu_custom_call.1} parent=1 // pred_check_branch
      %61 = sbr.rel (%p59) target = $region45
    $region44: #{tpu_custom_call.1} parent=1 // pred_region
      %vm62 = vcmask 0
      %63 = vst.msk [vmem:[#allocation7] sm:$0x1] %vm62, 0.0
    $region45: #{tpu_custom_call.1} parent=1 // pred_fallthru
      _
    %v64 = vld [vmem:[%s0] sm:$0xff]
    %v65 = vld [vmem:[%s0 + $0x8] sm:$0xff]
    %v66 = vld [vmem:[%s0 + $0x10] sm:$0xff]
    %v67 = vld [vmem:[%s0 + $0x18] sm:$0xff]
    %v68 = vld [vmem:[%s0 + $0x20] sm:$0xff]
    %v69 = vld [vmem:[%s0 + $0x28] sm:$0xff]
    %v70 = vld [vmem:[%s0 + $0x30] sm:$0xff]
    %v71 = vld [vmem:[%s0 + $0x38] sm:$0xff]
    %v72 = vld [vmem:[%s0 + $0x40] sm:$0xff]
    %v73 = vld [vmem:[%s0 + $0x48] sm:$0xff]
    %v74 = vld [vmem:[%s0 + $0x50] sm:$0xff]
    %v75 = vld [vmem:[%s0 + $0x58] sm:$0xff]
    %v76 = vld [vmem:[%s0 + $0x60] sm:$0xff]
    %v77 = vld [vmem:[%s0 + $0x68] sm:$0xff]
    %v78 = vld [vmem:[%s0 + $0x70] sm:$0xff]
    %v79 = vld [vmem:[%s0 + $0x78] sm:$0xff]
    %v80 = vld [vmem:[%s1] sm:$0xff]
    %v81 = vld [vmem:[%s1 + $0x8] sm:$0xff]
    %v82 = vld [vmem:[%s1 + $0x10] sm:$0xff]
    %v83 = vld [vmem:[%s1 + $0x18] sm:$0xff]
    %v84 = vld [vmem:[%s1 + $0x20] sm:$0xff]
    %v85 = vld [vmem:[%s1 + $0x28] sm:$0xff]
    %v86 = vld [vmem:[%s1 + $0x30] sm:$0xff]
    %v87 = vld [vmem:[%s1 + $0x38] sm:$0xff]
    %v88 = vld [vmem:[%s1 + $0x40] sm:$0xff]
    %v89 = vld [vmem:[%s1 + $0x48] sm:$0xff]
    %v90 = vld [vmem:[%s1 + $0x50] sm:$0xff]
    %v91 = vld [vmem:[%s1 + $0x58] sm:$0xff]
    %v92 = vld [vmem:[%s1 + $0x60] sm:$0xff]
    %v93 = vld [vmem:[%s1 + $0x68] sm:$0xff]
    %v94 = vld [vmem:[%s1 + $0x70] sm:$0xff]
    %v95 = vld [vmem:[%s1 + $0x78] sm:$0xff]
    %v96 = vld [vmem:[#allocation2] sm:$0xff]
    %v97 = vld [vmem:[#allocation2 + $0x8] sm:$0xff]
    %v98 = vld [vmem:[#allocation2 + $0x10] sm:$0xff]
    %v99 = vld [vmem:[#allocation2 + $0x18] sm:$0xff]
    %v100 = vld [vmem:[#allocation2 + $0x20] sm:$0xff]
    %v101 = vld [vmem:[#allocation2 + $0x28] sm:$0xff]
    %v102 = vld [vmem:[#allocation2 + $0x30] sm:$0xff]
    %v103 = vld [vmem:[#allocation2 + $0x38] sm:$0xff]
    %v104 = vld [vmem:[#allocation2 + $0x40] sm:$0xff]
    %v105 = vld [vmem:[#allocation2 + $0x48] sm:$0xff]
    %v106 = vld [vmem:[#allocation2 + $0x50] sm:$0xff]
    %v107 = vld [vmem:[#allocation2 + $0x58] sm:$0xff]
    %v108 = vld [vmem:[#allocation2 + $0x60] sm:$0xff]
    %v109 = vld [vmem:[#allocation2 + $0x68] sm:$0xff]
    %v110 = vld [vmem:[#allocation2 + $0x70] sm:$0xff]
    %v111 = vld [vmem:[#allocation2 + $0x78] sm:$0xff]
    %v112 = vld [vmem:[#allocation5] sm:$0xff]
    %v113 = vld [vmem:[#allocation5 + $0x8] sm:$0xff]
    %v114 = vld [vmem:[#allocation5 + $0x10] sm:$0xff]
    %v115 = vld [vmem:[#allocation5 + $0x18] sm:$0xff]
    %v116 = vld [vmem:[#allocation5 + $0x20] sm:$0xff]
    %v117 = vld [vmem:[#allocation5 + $0x28] sm:$0xff]
    %v118 = vld [vmem:[#allocation5 + $0x30] sm:$0xff]
    %v119 = vld [vmem:[#allocation5 + $0x38] sm:$0xff]
    %v120 = vld [vmem:[#allocation5 + $0x40] sm:$0xff]
    %v121 = vld [vmem:[#allocation5 + $0x48] sm:$0xff]
    %v122 = vld [vmem:[#allocation5 + $0x50] sm:$0xff]
    %v123 = vld [vmem:[#allocation5 + $0x58] sm:$0xff]
    %v124 = vld [vmem:[#allocation5 + $0x60] sm:$0xff]
    %v125 = vld [vmem:[#allocation5 + $0x68] sm:$0xff]
    %v126 = vld [vmem:[#allocation5 + $0x70] sm:$0xff]
    %v127 = vld [vmem:[#allocation5 + $0x78] sm:$0xff]
    %128 = vmatprep.subr.mxu0 0.0
    %129 = vmatpush1.xpose.msra.mxu0 %v96
    %130 = vmatprep.subr.mxu0 0.0
    %131 = vmatpush1.xpose.msra.mxu0 %v97
    %132 = vmatprep.subr.mxu0 0.0
    %133 = vmatpush1.xpose.msra.mxu0 %v98
    %134 = vmatprep.subr.mxu0 0.0
    %135 = vmatpush1.xpose.msra.mxu0 %v99
    %136 = vmatprep.subr.mxu0 0.0
    %137 = vmatpush1.xpose.msra.mxu0 %v100
    %138 = vmatprep.subr.mxu0 0.0
    %139 = vmatpush1.xpose.msra.mxu0 %v101
    %140 = vmatprep.subr.mxu0 0.0
    %141 = vmatpush1.xpose.msra.mxu0 %v102
    %142 = vmatprep.subr.mxu0 0.0
    %143 = vmatpush1.xpose.msra.mxu0 %v103
    %144 = vmatprep.subr.mxu0 0.0
    %145 = vmatpush1.xpose.msra.mxu0 %v104
    %146 = vmatprep.subr.mxu0 0.0
    %147 = vmatpush1.xpose.msra.mxu0 %v105
    %148 = vmatprep.subr.mxu0 0.0
    %149 = vmatpush1.xpose.msra.mxu0 %v106
    %150 = vmatprep.subr.mxu0 0.0
    %151 = vmatpush1.xpose.msra.mxu0 %v107
    %152 = vmatprep.subr.mxu0 0.0
    %153 = vmatpush1.xpose.msra.mxu0 %v108
    %154 = vmatprep.subr.mxu0 0.0
    %155 = vmatpush1.xpose.msra.mxu0 %v109
    %156 = vmatprep.subr.mxu0 0.0
    %157 = vmatpush1.xpose.msra.mxu0 %v110
    %158 = vmatprep.subr.mxu0 0.0
    %159 = vmatpush1.xpose.msra.mxu0 %v111
    %160 = vmatprep.subr.mxu0 0.0
    %161 = vmatpush1.xpose.msra.mxu0 0.0
    %162 = vmatprep.subr.mxu0 0.0
    %163 = vmatpush1.xpose.msra.mxu0 0.0
    %164 = vmatprep.subr.mxu0 0.0
    %165 = vmatpush1.xpose.msra.mxu0 0.0
    %166 = vmatprep.subr.mxu0 0.0
    %167 = vmatpush1.xpose.msra.mxu0 0.0
    %168 = vmatprep.subr.mxu0 0.0
    %169 = vmatpush1.xpose.msra.mxu0 0.0
    %170 = vmatprep.subr.mxu0 0.0
    %171 = vmatpush1.xpose.msra.mxu0 0.0
    %172 = vmatprep.subr.mxu0 0.0
    %173 = vmatpush1.xpose.msra.mxu0 0.0
    %174 = vmatprep.subr.mxu0 0.0
    %175 = vmatpush1.xpose.msra.mxu0 0.0
    %176 = vmatprep.subr.mxu0 0.0
    %177 = vmatpush1.xpose.msra.mxu0 0.0
    %178 = vmatprep.subr.mxu0 0.0
    %179 = vmatpush1.xpose.msra.mxu0 0.0
    %180 = vmatprep.subr.mxu0 0.0
    %181 = vmatpush1.xpose.msra.mxu0 0.0
    %182 = vmatprep.subr.mxu0 0.0
    %183 = vmatpush1.xpose.msra.mxu0 0.0
    %184 = vmatprep.subr.mxu0 0.0
    %185 = vmatpush1.xpose.msra.mxu0 0.0
    %186 = vmatprep.subr.mxu0 0.0
    %187 = vmatpush1.xpose.msra.mxu0 0.0
    %188 = vmatprep.subr.mxu0 0.0
    %189 = vmatpush1.xpose.msra.mxu0 0.0
    %190 = vmatprep.subr.mxu0 0.0
    %191 = vmatpush1.xpose.msra.mxu0 0.0
    %192 = vmatprep.mubr.f32.mxu0 0.0
    %193 = vmatmul.mubr.f32.gmra.mrb[0].mxu0 %v64
    %v194 = vpop.f32.mrb[0].mxu0
    %v195 = vadd.f32 0.0, %v194
    %v196 = vpop.f32.mrb[0].mxu0
    %197 = vmatprep.mubr.f32.mxu0 0.0
    %198 = vmatmul.mubr.f32.gmra.mrb[0].mxu0 %v65
    %v199 = vpop.f32.mrb[0].mxu0
    %v200 = vadd.f32 0.0, %v199
    %v201 = vpop.f32.mrb[0].mxu0
    %202 = vmatprep.mubr.f32.mxu0 0.0
    %203 = vmatmul.mubr.f32.gmra.mrb[0].mxu0 %v66
    %v204 = vpop.f32.mrb[0].mxu0
    %v205 = vadd.f32 0.0, %v204
    %v206 = vpop.f32.mrb[0].mxu0
    %207 = vmatprep.mubr.f32.mxu0 0.0
    %208 = vmatmul.mubr.f32.gmra.mrb[0].mxu0 %v67
    %v209 = vpop.f32.mrb[0].mxu0
    %v210 = vadd.f32 0.0, %v209
    %v211 = vpop.f32.mrb[0].mxu0
    %212 = vmatprep.mubr.f32.mxu0 0.0
    %213 = vmatmul.mubr.f32.gmra.mrb[0].mxu0 %v68
    %v214 = vpop.f32.mrb[0].mxu0
    %v215 = vadd.f32 0.0, %v214
    %v216 = vpop.f32.mrb[0].mxu0
    %217 = vmatprep.mubr.f32.mxu0 0.0
    %218 = vmatmul.mubr.f32.gmra.mrb[0].mxu0 %v69
    %v219 = vpop.f32.mrb[0].mxu0
    %v220 = vadd.f32 0.0, %v219
    %v221 = vpop.f32.mrb[0].mxu0
    %222 = vmatprep.mubr.f32.mxu0 0.0
    %223 = vmatmul.mubr.f32.gmra.mrb[0].mxu0 %v70
    %v224 = vpop.f32.mrb[0].mxu0
    %v225 = vadd.f32 0.0, %v224
    %v226 = vpop.f32.mrb[0].mxu0
    %227 = vmatprep.mubr.f32.mxu0 0.0
    %228 = vmatmul.mubr.f32.gmra.mrb[0].mxu0 %v71
    %v229 = vpop.f32.mrb[0].mxu0
    %v230 = vadd.f32 0.0, %v229
    %v231 = vpop.f32.mrb[0].mxu0
    %232 = vmatprep.mubr.f32.mxu0 0.0
    %233 = vmatmul.mubr.f32.gmra.mrb[0].mxu0 %v72
    %v234 = vpop.f32.mrb[0].mxu0
    %v235 = vadd.f32 0.0, %v234
    %v236 = vpop.f32.mrb[0].mxu0
    %237 = vmatprep.mubr.f32.mxu0 0.0
    %238 = vmatmul.mubr.f32.gmra.mrb[0].mxu0 %v73
    %v239 = vpop.f32.mrb[0].mxu0
    %v240 = vadd.f32 0.0, %v239
    %v241 = vpop.f32.mrb[0].mxu0
    %242 = vmatprep.mubr.f32.mxu0 0.0
    %243 = vmatmul.mubr.f32.gmra.mrb[0].mxu0 %v74
    %v244 = vpop.f32.mrb[0].mxu0
    %v245 = vadd.f32 0.0, %v244
    %v246 = vpop.f32.mrb[0].mxu0
    %247 = vmatprep.mubr.f32.mxu0 0.0
    %248 = vmatmul.mubr.f32.gmra.mrb[0].mxu0 %v75
    %v249 = vpop.f32.mrb[0].mxu0
    %v250 = vadd.f32 0.0, %v249
    %v251 = vpop.f32.mrb[0].mxu0
    %252 = vmatprep.mubr.f32.mxu0 0.0
    %253 = vmatmul.mubr.f32.gmra.mrb[0].mxu0 %v76
    %v254 = vpop.f32.mrb[0].mxu0
    %v255 = vadd.f32 0.0, %v254
    %v256 = vpop.f32.mrb[0].mxu0
    %257 = vmatprep.mubr.f32.mxu0 0.0
    %258 = vmatmul.mubr.f32.gmra.mrb[0].mxu0 %v77
    %v259 = vpop.f32.mrb[0].mxu0
    %v260 = vadd.f32 0.0, %v259
    %v261 = vpop.f32.mrb[0].mxu0
    %262 = vmatprep.mubr.f32.mxu0 0.0
    %263 = vmatmul.mubr.f32.gmra.mrb[0].mxu0 %v78
    %v264 = vpop.f32.mrb[0].mxu0
    %v265 = vadd.f32 0.0, %v264
    %v266 = vpop.f32.mrb[0].mxu0
    %267 = vmatprep.mubr.f32.mxu0 0.0
    %268 = vmatmul.mubr.f32.gmra.mrb[0].mxu0 %v79
    %v269 = vpop.f32.mrb[0].mxu0
    %v270 = vadd.f32 0.0, %v269
    %v271 = vpop.f32.mrb[0].mxu0
    %272 = vdwg.mxu0
    %273 = vmatprep.subr.mxu0 0.0
    %274 = vmatpush1.xpose.msra.mxu0 %v112
    %275 = vmatprep.subr.mxu0 0.0
    %276 = vmatpush1.xpose.msra.mxu0 %v113
    %277 = vmatprep.subr.mxu0 0.0
    %278 = vmatpush1.xpose.msra.mxu0 %v114
    %279 = vmatprep.subr.mxu0 0.0
    %280 = vmatpush1.xpose.msra.mxu0 %v115
    %281 = vmatprep.subr.mxu0 0.0
    %282 = vmatpush1.xpose.msra.mxu0 %v116
    %283 = vmatprep.subr.mxu0 0.0
    %284 = vmatpush1.xpose.msra.mxu0 %v117
    %285 = vmatprep.subr.mxu0 0.0
    %286 = vmatpush1.xpose.msra.mxu0 %v118
    %287 = vmatprep.subr.mxu0 0.0
    %288 = vmatpush1.xpose.msra.mxu0 %v119
    %289 = vmatprep.subr.mxu0 0.0
    %290 = vmatpush1.xpose.msra.mxu0 %v120
    %291 = vmatprep.subr.mxu0 0.0
    %292 = vmatpush1.xpose.msra.mxu0 %v121
    %293 = vmatprep.subr.mxu0 0.0
    %294 = vmatpush1.xpose.msra.mxu0 %v122
    %295 = vmatprep.subr.mxu0 0.0
    %296 = vmatpush1.xpose.msra.mxu0 %v123
    %297 = vmatprep.subr.mxu0 0.0
    %298 = vmatpush1.xpose.msra.mxu0 %v124
    %299 = vmatprep.subr.mxu0 0.0
    %300 = vmatpush1.xpose.msra.mxu0 %v125
    %301 = vmatprep.subr.mxu0 0.0
    %302 = vmatpush1.xpose.msra.mxu0 %v126
    %303 = vmatprep.subr.mxu0 0.0
    %304 = vmatpush1.xpose.msra.mxu0 %v127
    %305 = vmatprep.subr.mxu0 0.0
    %306 = vmatpush1.xpose.msra.mxu0 0.0
    %307 = vmatprep.subr.mxu0 0.0
    %308 = vmatpush1.xpose.msra.mxu0 0.0
    %309 = vmatprep.subr.mxu0 0.0
    %310 = vmatpush1.xpose.msra.mxu0 0.0
    %311 = vmatprep.subr.mxu0 0.0
    %312 = vmatpush1.xpose.msra.mxu0 0.0
    %313 = vmatprep.subr.mxu0 0.0
    %314 = vmatpush1.xpose.msra.mxu0 0.0
    %315 = vmatprep.subr.mxu0 0.0
    %316 = vmatpush1.xpose.msra.mxu0 0.0
    %317 = vmatprep.subr.mxu0 0.0
    %318 = vmatpush1.xpose.msra.mxu0 0.0
    %319 = vmatprep.subr.mxu0 0.0
    %320 = vmatpush1.xpose.msra.mxu0 0.0
    %321 = vmatprep.subr.mxu0 0.0
    %322 = vmatpush1.xpose.msra.mxu0 0.0
    %323 = vmatprep.subr.mxu0 0.0
    %324 = vmatpush1.xpose.msra.mxu0 0.0
    %325 = vmatprep.subr.mxu0 0.0
    %326 = vmatpush1.xpose.msra.mxu0 0.0
    %327 = vmatprep.subr.mxu0 0.0
    %328 = vmatpush1.xpose.msra.mxu0 0.0
    %329 = vmatprep.subr.mxu0 0.0
    %330 = vmatpush1.xpose.msra.mxu0 0.0
    %331 = vmatprep.subr.mxu0 0.0
    %332 = vmatpush1.xpose.msra.mxu0 0.0
    %333 = vmatprep.subr.mxu0 0.0
    %334 = vmatpush1.xpose.msra.mxu0 0.0
    %335 = vmatprep.subr.mxu0 0.0
    %336 = vmatpush1.xpose.msra.mxu0 0.0
    %337 = vmatprep.mubr.f32.mxu0 0.0
    %338 = vmatmul.mubr.f32.gmra.mrb[0].mxu0 %v64
    %v339 = vpop.f32.mrb[0].mxu0
    %v340 = vadd.f32 0.0, %v339
    %v341 = vpop.f32.mrb[0].mxu0
    %342 = vmatprep.mubr.f32.mxu0 0.0
    %343 = vmatmul.mubr.f32.gmra.mrb[0].mxu0 %v65
    %v344 = vpop.f32.mrb[0].mxu0
    %v345 = vadd.f32 0.0, %v344
    %v346 = vpop.f32.mrb[0].mxu0
    %347 = vmatprep.mubr.f32.mxu0 0.0
    %348 = vmatmul.mubr.f32.gmra.mrb[0].mxu0 %v66
    %v349 = vpop.f32.mrb[0].mxu0
    %v350 = vadd.f32 0.0, %v349
    %v351 = vpop.f32.mrb[0].mxu0
    %352 = vmatprep.mubr.f32.mxu0 0.0
    %353 = vmatmul.mubr.f32.gmra.mrb[0].mxu0 %v67
    %v354 = vpop.f32.mrb[0].mxu0
    %v355 = vadd.f32 0.0, %v354
    %v356 = vpop.f32.mrb[0].mxu0
    %357 = vmatprep.mubr.f32.mxu0 0.0
    %358 = vmatmul.mubr.f32.gmra.mrb[0].mxu0 %v68
    %v359 = vpop.f32.mrb[0].mxu0
    %v360 = vadd.f32 0.0, %v359
    %v361 = vpop.f32.mrb[0].mxu0
    %362 = vmatprep.mubr.f32.mxu0 0.0
    %363 = vmatmul.mubr.f32.gmra.mrb[0].mxu0 %v69
    %v364 = vpop.f32.mrb[0].mxu0
    %v365 = vadd.f32 0.0, %v364
    %v366 = vpop.f32.mrb[0].mxu0
    %367 = vmatprep.mubr.f32.mxu0 0.0
    %368 = vmatmul.mubr.f32.gmra.mrb[0].mxu0 %v70
    %v369 = vpop.f32.mrb[0].mxu0
    %v370 = vadd.f32 0.0, %v369
    %v371 = vpop.f32.mrb[0].mxu0
    %372 = vmatprep.mubr.f32.mxu0 0.0
    %373 = vmatmul.mubr.f32.gmra.mrb[0].mxu0 %v71
    %v374 = vpop.f32.mrb[0].mxu0
    %v375 = vadd.f32 0.0, %v374
    %v376 = vpop.f32.mrb[0].mxu0
    %377 = vmatprep.mubr.f32.mxu0 0.0
    %378 = vmatmul.mubr.f32.gmra.mrb[0].mxu0 %v72
    %v379 = vpop.f32.mrb[0].mxu0
    %v380 = vadd.f32 0.0, %v379
    %v381 = vpop.f32.mrb[0].mxu0
    %382 = vmatprep.mubr.f32.mxu0 0.0
    %383 = vmatmul.mubr.f32.gmra.mrb[0].mxu0 %v73
    %v384 = vpop.f32.mrb[0].mxu0
    %v385 = vadd.f32 0.0, %v384
    %v386 = vpop.f32.mrb[0].mxu0
    %387 = vmatprep.mubr.f32.mxu0 0.0
    %388 = vmatmul.mubr.f32.gmra.mrb[0].mxu0 %v74
    %v389 = vpop.f32.mrb[0].mxu0
    %v390 = vadd.f32 0.0, %v389
    %v391 = vpop.f32.mrb[0].mxu0
    %392 = vmatprep.mubr.f32.mxu0 0.0
    %393 = vmatmul.mubr.f32.gmra.mrb[0].mxu0 %v75
    %v394 = vpop.f32.mrb[0].mxu0
    %v395 = vadd.f32 0.0, %v394
    %v396 = vpop.f32.mrb[0].mxu0
    %397 = vmatprep.mubr.f32.mxu0 0.0
    %398 = vmatmul.mubr.f32.gmra.mrb[0].mxu0 %v76
    %v399 = vpop.f32.mrb[0].mxu0
    %v400 = vadd.f32 0.0, %v399
    %v401 = vpop.f32.mrb[0].mxu0
    %402 = vmatprep.mubr.f32.mxu0 0.0
    %403 = vmatmul.mubr.f32.gmra.mrb[0].mxu0 %v77
    %v404 = vpop.f32.mrb[0].mxu0
    %v405 = vadd.f32 0.0, %v404
    %v406 = vpop.f32.mrb[0].mxu0
    %407 = vmatprep.mubr.f32.mxu0 0.0
    %408 = vmatmul.mubr.f32.gmra.mrb[0].mxu0 %v78
    %v409 = vpop.f32.mrb[0].mxu0
    %v410 = vadd.f32 0.0, %v409
    %v411 = vpop.f32.mrb[0].mxu0
    %412 = vmatprep.mubr.f32.mxu0 0.0
    %413 = vmatmul.mubr.f32.gmra.mrb[0].mxu0 %v79
    %v414 = vpop.f32.mrb[0].mxu0
    %v415 = vadd.f32 0.0, %v414
    %v416 = vpop.f32.mrb[0].mxu0
    %417 = vmatprep.mubr.f32.mxu0 0.0
    %418 = vmatmul.mubr.f32.gmra.mrb[0].mxu0 %v80
    %v419 = vpop.f32.mrb[0].mxu0
    %v420 = vadd.f32 0.0, %v419
    %v421 = vpop.f32.mrb[0].mxu0
    %422 = vmatprep.mubr.f32.mxu0 0.0
    %423 = vmatmul.mubr.f32.gmra.mrb[0].mxu0 %v81
    %v424 = vpop.f32.mrb[0].mxu0
    %v425 = vadd.f32 0.0, %v424
    %v426 = vpop.f32.mrb[0].mxu0
    %427 = vmatprep.mubr.f32.mxu0 0.0
    %428 = vmatmul.mubr.f32.gmra.mrb[0].mxu0 %v82
    %v429 = vpop.f32.mrb[0].mxu0
    %v430 = vadd.f32 0.0, %v429
    %v431 = vpop.f32.mrb[0].mxu0
    %432 = vmatprep.mubr.f32.mxu0 0.0
    %433 = vmatmul.mubr.f32.gmra.mrb[0].mxu0 %v83
    %v434 = vpop.f32.mrb[0].mxu0
    %v435 = vadd.f32 0.0, %v434
    %v436 = vpop.f32.mrb[0].mxu0
    %437 = vmatprep.mubr.f32.mxu0 0.0
    %438 = vmatmul.mubr.f32.gmra.mrb[0].mxu0 %v84
    %v439 = vpop.f32.mrb[0].mxu0
    %v440 = vadd.f32 0.0, %v439
    %v441 = vpop.f32.mrb[0].mxu0
    %442 = vmatprep.mubr.f32.mxu0 0.0
    %443 = vmatmul.mubr.f32.gmra.mrb[0].mxu0 %v85
    %v444 = vpop.f32.mrb[0].mxu0
    %v445 = vadd.f32 0.0, %v444
    %v446 = vpop.f32.mrb[0].mxu0
    %447 = vmatprep.mubr.f32.mxu0 0.0
    %448 = vmatmul.mubr.f32.gmra.mrb[0].mxu0 %v86
    %v449 = vpop.f32.mrb[0].mxu0
    %v450 = vadd.f32 0.0, %v449
    %v451 = vpop.f32.mrb[0].mxu0
    %452 = vmatprep.mubr.f32.mxu0 0.0
    %453 = vmatmul.mubr.f32.gmra.mrb[0].mxu0 %v87
    %v454 = vpop.f32.mrb[0].mxu0
    %v455 = vadd.f32 0.0, %v454
    %v456 = vpop.f32.mrb[0].mxu0
    %457 = vmatprep.mubr.f32.mxu0 0.0
    %458 = vmatmul.mubr.f32.gmra.mrb[0].mxu0 %v88
    %v459 = vpop.f32.mrb[0].mxu0
    %v460 = vadd.f32 0.0, %v459
    %v461 = vpop.f32.mrb[0].mxu0
    %462 = vmatprep.mubr.f32.mxu0 0.0
    %463 = vmatmul.mubr.f32.gmra.mrb[0].mxu0 %v89
    %v464 = vpop.f32.mrb[0].mxu0
    %v465 = vadd.f32 0.0, %v464
    %v466 = vpop.f32.mrb[0].mxu0
    %467 = vmatprep.mubr.f32.mxu0 0.0
    %468 = vmatmul.mubr.f32.gmra.mrb[0].mxu0 %v90
    %v469 = vpop.f32.mrb[0].mxu0
    %v470 = vadd.f32 0.0, %v469
    %v471 = vpop.f32.mrb[0].mxu0
    %472 = vmatprep.mubr.f32.mxu0 0.0
    %473 = vmatmul.mubr.f32.gmra.mrb[0].mxu0 %v91
    %v474 = vpop.f32.mrb[0].mxu0
    %v475 = vadd.f32 0.0, %v474
    %v476 = vpop.f32.mrb[0].mxu0
    %477 = vmatprep.mubr.f32.mxu0 0.0
    %478 = vmatmul.mubr.f32.gmra.mrb[0].mxu0 %v92
    %v479 = vpop.f32.mrb[0].mxu0
    %v480 = vadd.f32 0.0, %v479
    %v481 = vpop.f32.mrb[0].mxu0
    %482 = vmatprep.mubr.f32.mxu0 0.0
    %483 = vmatmul.mubr.f32.gmra.mrb[0].mxu0 %v93
    %v484 = vpop.f32.mrb[0].mxu0
    %v485 = vadd.f32 0.0, %v484
    %v486 = vpop.f32.mrb[0].mxu0
    %487 = vmatprep.mubr.f32.mxu0 0.0
    %488 = vmatmul.mubr.f32.gmra.mrb[0].mxu0 %v94
    %v489 = vpop.f32.mrb[0].mxu0
    %v490 = vadd.f32 0.0, %v489
    %v491 = vpop.f32.mrb[0].mxu0
    %492 = vmatprep.mubr.f32.mxu0 0.0
    %493 = vmatmul.mubr.f32.gmra.mrb[0].mxu0 %v95
    %v494 = vpop.f32.mrb[0].mxu0
    %v495 = vadd.f32 0.0, %v494
    %v496 = vpop.f32.mrb[0].mxu0
    %497 = vdwg.mxu0
    %v498 = vld [vmem:[%s4] sm:$0xff]
    %v499 = vld [vmem:[%s4 + $0x8] sm:$0xff]
    %v500 = vld [vmem:[%s4 + $0x10] sm:$0xff]
    %v501 = vld [vmem:[%s4 + $0x18] sm:$0xff]
    %v502 = vld [vmem:[%s4 + $0x20] sm:$0xff]
    %v503 = vld [vmem:[%s4 + $0x28] sm:$0xff]
    %v504 = vld [vmem:[%s4 + $0x30] sm:$0xff]
    %v505 = vld [vmem:[%s4 + $0x38] sm:$0xff]
    %v506 = vld [vmem:[%s4 + $0x40] sm:$0xff]
    %v507 = vld [vmem:[%s4 + $0x48] sm:$0xff]
    %v508 = vld [vmem:[%s4 + $0x50] sm:$0xff]
    %v509 = vld [vmem:[%s4 + $0x58] sm:$0xff]
    %v510 = vld [vmem:[%s4 + $0x60] sm:$0xff]
    %v511 = vld [vmem:[%s4 + $0x68] sm:$0xff]
    %v512 = vld [vmem:[%s4 + $0x70] sm:$0xff]
    %v513 = vld [vmem:[%s4 + $0x78] sm:$0xff]
    %v514 = vld [vmem:[%s5] sm:$0xff]
    %v515 = vld [vmem:[%s5 + $0x8] sm:$0xff]
    %v516 = vld [vmem:[%s5 + $0x10] sm:$0xff]
    %v517 = vld [vmem:[%s5 + $0x18] sm:$0xff]
    %v518 = vld [vmem:[%s5 + $0x20] sm:$0xff]
    %v519 = vld [vmem:[%s5 + $0x28] sm:$0xff]
    %v520 = vld [vmem:[%s5 + $0x30] sm:$0xff]
    %v521 = vld [vmem:[%s5 + $0x38] sm:$0xff]
    %v522 = vld [vmem:[%s5 + $0x40] sm:$0xff]
    %v523 = vld [vmem:[%s5 + $0x48] sm:$0xff]
    %v524 = vld [vmem:[%s5 + $0x50] sm:$0xff]
    %v525 = vld [vmem:[%s5 + $0x58] sm:$0xff]
    %v526 = vld [vmem:[%s5 + $0x60] sm:$0xff]
    %v527 = vld [vmem:[%s5 + $0x68] sm:$0xff]
    %v528 = vld [vmem:[%s5 + $0x70] sm:$0xff]
    %v529 = vld [vmem:[%s5 + $0x78] sm:$0xff]
    %v530 = vld [vmem:[%s6] sm:$0x1]
    %v531 = vld [vmem:[%s7] sm:$0x1]
    %533 = vset.pattern.permute.xlu0 0
    %534 = vperm.xlu0 %533, %v498
    %v535 = vpop.permute.xlu0 %534
    %538 = vset.pattern.permute.xlu0 0
    %539 = vperm.xlu0 %538, %v499
    %v540 = vpop.permute.xlu0 %539
    %543 = vset.pattern.permute.xlu0 0
    %544 = vperm.xlu0 %543, %v500
    %v545 = vpop.permute.xlu0 %544
    %548 = vset.pattern.permute.xlu0 0
    %549 = vperm.xlu0 %548, %v501
    %v550 = vpop.permute.xlu0 %549
    %553 = vset.pattern.permute.xlu0 0
    %554 = vperm.xlu0 %553, %v502
    %v555 = vpop.permute.xlu0 %554
    %558 = vset.pattern.permute.xlu0 0
    %559 = vperm.xlu0 %558, %v503
    %v560 = vpop.permute.xlu0 %559
    %563 = vset.pattern.permute.xlu0 0
    %564 = vperm.xlu0 %563, %v504
    %v565 = vpop.permute.xlu0 %564
    %568 = vset.pattern.permute.xlu0 0
    %569 = vperm.xlu0 %568, %v505
    %v570 = vpop.permute.xlu0 %569
    %573 = vset.pattern.permute.xlu0 0
    %574 = vperm.xlu0 %573, %v506
    %v575 = vpop.permute.xlu0 %574
    %578 = vset.pattern.permute.xlu0 0
    %579 = vperm.xlu0 %578, %v507
    %v580 = vpop.permute.xlu0 %579
    %583 = vset.pattern.permute.xlu0 0
    %584 = vperm.xlu0 %583, %v508
    %v585 = vpop.permute.xlu0 %584
    %588 = vset.pattern.permute.xlu0 0
    %589 = vperm.xlu0 %588, %v509
    %v590 = vpop.permute.xlu0 %589
    %593 = vset.pattern.permute.xlu0 0
    %594 = vperm.xlu0 %593, %v510
    %v595 = vpop.permute.xlu0 %594
    %598 = vset.pattern.permute.xlu0 0
    %599 = vperm.xlu0 %598, %v511
    %v600 = vpop.permute.xlu0 %599
    %603 = vset.pattern.permute.xlu0 0
    %604 = vperm.xlu0 %603, %v512
    %v605 = vpop.permute.xlu0 %604
    %608 = vset.pattern.permute.xlu0 0
    %609 = vperm.xlu0 %608, %v513
    %v610 = vpop.permute.xlu0 %609
    %v613 = vlaneseq
    %v614 = vshrl.u32 %v613, 7
    %v615 = vsub.s32 0, %v614
    %v616 = vrot.slane %v530, %v615
    %v618 = vadd.f32 %v535, %v616
    %v619 = vadd.f32 %v540, %v616
    %v620 = vadd.f32 %v545, %v616
    %v621 = vadd.f32 %v550, %v616
    %v622 = vadd.f32 %v555, %v616
    %v623 = vadd.f32 %v560, %v616
    %v624 = vadd.f32 %v565, %v616
    %v625 = vadd.f32 %v570, %v616
    %v626 = vadd.f32 %v575, %v616
    %v627 = vadd.f32 %v580, %v616
    %v628 = vadd.f32 %v585, %v616
    %v629 = vadd.f32 %v590, %v616
    %v630 = vadd.f32 %v595, %v616
    %v631 = vadd.f32 %v600, %v616
    %v632 = vadd.f32 %v605, %v616
    %v633 = vadd.f32 %v610, %v616
    %v634 = vmul.f32 %v195, 2.0
    %v635 = vmul.f32 %v200, 2.0
    %v636 = vmul.f32 %v205, 2.0
    %v637 = vmul.f32 %v210, 2.0
    %v638 = vmul.f32 %v215, 2.0
    %v639 = vmul.f32 %v220, 2.0
    %v640 = vmul.f32 %v225, 2.0
    %v641 = vmul.f32 %v230, 2.0
    %v642 = vmul.f32 %v235, 2.0
    %v643 = vmul.f32 %v240, 2.0
    %v644 = vmul.f32 %v245, 2.0
    %v645 = vmul.f32 %v250, 2.0
    %v646 = vmul.f32 %v255, 2.0
    %v647 = vmul.f32 %v260, 2.0
    %v648 = vmul.f32 %v265, 2.0
    %v649 = vmul.f32 %v270, 2.0
    %v650 = vsub.f32 %v618, %v634
    %v651 = vsub.f32 %v619, %v635
    %v652 = vsub.f32 %v620, %v636
    %v653 = vsub.f32 %v621, %v637
    %v654 = vsub.f32 %v622, %v638
    %v655 = vsub.f32 %v623, %v639
    %v656 = vsub.f32 %v624, %v640
    %v657 = vsub.f32 %v625, %v641
    %v658 = vsub.f32 %v626, %v642
    %v659 = vsub.f32 %v627, %v643
    %v660 = vsub.f32 %v628, %v644
    %v661 = vsub.f32 %v629, %v645
    %v662 = vsub.f32 %v630, %v646
    %v663 = vsub.f32 %v631, %v647
    %v664 = vsub.f32 %v632, %v648
    %v665 = vsub.f32 %v633, %v649
    %667 = vset.pattern.permute.xlu0 0
    %668 = vperm.xlu0 %667, %v514
    %v669 = vpop.permute.xlu0 %668
    %672 = vset.pattern.permute.xlu0 0
    %673 = vperm.xlu0 %672, %v515
    %v674 = vpop.permute.xlu0 %673
    %677 = vset.pattern.permute.xlu0 0
    %678 = vperm.xlu0 %677, %v516
    %v679 = vpop.permute.xlu0 %678
    %682 = vset.pattern.permute.xlu0 0
    %683 = vperm.xlu0 %682, %v517
    %v684 = vpop.permute.xlu0 %683
    %687 = vset.pattern.permute.xlu0 0
    %688 = vperm.xlu0 %687, %v518
    %v689 = vpop.permute.xlu0 %688
    %692 = vset.pattern.permute.xlu0 0
    %693 = vperm.xlu0 %692, %v519
    %v694 = vpop.permute.xlu0 %693
    %697 = vset.pattern.permute.xlu0 0
    %698 = vperm.xlu0 %697, %v520
    %v699 = vpop.permute.xlu0 %698
    %702 = vset.pattern.permute.xlu0 0
    %703 = vperm.xlu0 %702, %v521
    %v704 = vpop.permute.xlu0 %703
    %707 = vset.pattern.permute.xlu0 0
    %708 = vperm.xlu0 %707, %v522
    %v709 = vpop.permute.xlu0 %708
    %712 = vset.pattern.permute.xlu0 0
    %713 = vperm.xlu0 %712, %v523
    %v714 = vpop.permute.xlu0 %713
    %717 = vset.pattern.permute.xlu0 0
    %718 = vperm.xlu0 %717, %v524
    %v719 = vpop.permute.xlu0 %718
    %722 = vset.pattern.permute.xlu0 0
    %723 = vperm.xlu0 %722, %v525
    %v724 = vpop.permute.xlu0 %723
    %727 = vset.pattern.permute.xlu0 0
    %728 = vperm.xlu0 %727, %v526
    %v729 = vpop.permute.xlu0 %728
    %732 = vset.pattern.permute.xlu0 0
    %733 = vperm.xlu0 %732, %v527
    %v734 = vpop.permute.xlu0 %733
    %737 = vset.pattern.permute.xlu0 0
    %738 = vperm.xlu0 %737, %v528
    %v739 = vpop.permute.xlu0 %738
    %742 = vset.pattern.permute.xlu0 0
    %743 = vperm.xlu0 %742, %v529
    %v744 = vpop.permute.xlu0 %743
    %v747 = vlaneseq
    %v748 = vshrl.u32 %v747, 7
    %v749 = vsub.s32 0, %v748
    %v750 = vrot.slane %v531, %v749
    %v752 = vadd.f32 %v669, %v750
    %v753 = vadd.f32 %v674, %v750
    %v754 = vadd.f32 %v679, %v750
    %v755 = vadd.f32 %v684, %v750
    %v756 = vadd.f32 %v689, %v750
    %v757 = vadd.f32 %v694, %v750
    %v758 = vadd.f32 %v699, %v750
    %v759 = vadd.f32 %v704, %v750
    %v760 = vadd.f32 %v709, %v750
    %v761 = vadd.f32 %v714, %v750
    %v762 = vadd.f32 %v719, %v750
    %v763 = vadd.f32 %v724, %v750
    %v764 = vadd.f32 %v729, %v750
    %v765 = vadd.f32 %v734, %v750
    %v766 = vadd.f32 %v739, %v750
    %v767 = vadd.f32 %v744, %v750
    %v768 = vmul.f32 %v420, 2.0
    %v769 = vmul.f32 %v425, 2.0
    %v770 = vmul.f32 %v430, 2.0
    %v771 = vmul.f32 %v435, 2.0
    %v772 = vmul.f32 %v440, 2.0
    %v773 = vmul.f32 %v445, 2.0
    %v774 = vmul.f32 %v450, 2.0
    %v775 = vmul.f32 %v455, 2.0
    %v776 = vmul.f32 %v460, 2.0
    %v777 = vmul.f32 %v465, 2.0
    %v778 = vmul.f32 %v470, 2.0
    %v779 = vmul.f32 %v475, 2.0
    %v780 = vmul.f32 %v480, 2.0
    %v781 = vmul.f32 %v485, 2.0
    %v782 = vmul.f32 %v490, 2.0
    %v783 = vmul.f32 %v495, 2.0
    %v784 = vsub.f32 %v752, %v768
    %v785 = vsub.f32 %v753, %v769
    %v786 = vsub.f32 %v754, %v770
    %v787 = vsub.f32 %v755, %v771
    %v788 = vsub.f32 %v756, %v772
    %v789 = vsub.f32 %v757, %v773
    %v790 = vsub.f32 %v758, %v774
    %v791 = vsub.f32 %v759, %v775
    %v792 = vsub.f32 %v760, %v776
    %v793 = vsub.f32 %v761, %v777
    %v794 = vsub.f32 %v762, %v778
    %v795 = vsub.f32 %v763, %v779
    %v796 = vsub.f32 %v764, %v780
    %v797 = vsub.f32 %v765, %v781
    %v798 = vsub.f32 %v766, %v782
    %v799 = vsub.f32 %v767, %v783
    %v800 = vadd.f32 %v535, %v750
    %v801 = vadd.f32 %v540, %v750
    %v802 = vadd.f32 %v545, %v750
    %v803 = vadd.f32 %v550, %v750
    %v804 = vadd.f32 %v555, %v750
    %v805 = vadd.f32 %v560, %v750
    %v806 = vadd.f32 %v565, %v750
    %v807 = vadd.f32 %v570, %v750
    %v808 = vadd.f32 %v575, %v750
    %v809 = vadd.f32 %v580, %v750
    %v810 = vadd.f32 %v585, %v750
    %v811 = vadd.f32 %v590, %v750
    %v812 = vadd.f32 %v595, %v750
    %v813 = vadd.f32 %v600, %v750
    %v814 = vadd.f32 %v605, %v750
    %v815 = vadd.f32 %v610, %v750
    %v816 = vmul.f32 %v340, 2.0
    %v817 = vmul.f32 %v345, 2.0
    %v818 = vmul.f32 %v350, 2.0
    %v819 = vmul.f32 %v355, 2.0
    %v820 = vmul.f32 %v360, 2.0
    %v821 = vmul.f32 %v365, 2.0
    %v822 = vmul.f32 %v370, 2.0
    %v823 = vmul.f32 %v375, 2.0
    %v824 = vmul.f32 %v380, 2.0
    %v825 = vmul.f32 %v385, 2.0
    %v826 = vmul.f32 %v390, 2.0
    %v827 = vmul.f32 %v395, 2.0
    %v828 = vmul.f32 %v400, 2.0
    %v829 = vmul.f32 %v405, 2.0
    %v830 = vmul.f32 %v410, 2.0
    %v831 = vmul.f32 %v415, 2.0
    %v832 = vsub.f32 %v800, %v816
    %v833 = vsub.f32 %v801, %v817
    %v834 = vsub.f32 %v802, %v818
    %v835 = vsub.f32 %v803, %v819
    %v836 = vsub.f32 %v804, %v820
    %v837 = vsub.f32 %v805, %v821
    %v838 = vsub.f32 %v806, %v822
    %v839 = vsub.f32 %v807, %v823
    %v840 = vsub.f32 %v808, %v824
    %v841 = vsub.f32 %v809, %v825
    %v842 = vsub.f32 %v810, %v826
    %v843 = vsub.f32 %v811, %v827
    %v844 = vsub.f32 %v812, %v828
    %v845 = vsub.f32 %v813, %v829
    %v846 = vsub.f32 %v814, %v830
    %v847 = vsub.f32 %v815, %v831
    %v848 = vadd.f32 %v650, 0.04
    %v849 = vadd.f32 %v651, 0.04
    %v850 = vadd.f32 %v652, 0.04
    %v851 = vadd.f32 %v653, 0.04
    %v852 = vadd.f32 %v654, 0.04
    %v853 = vadd.f32 %v655, 0.04
    %v854 = vadd.f32 %v656, 0.04
    %v855 = vadd.f32 %v657, 0.04
    %v856 = vadd.f32 %v658, 0.04
    %v857 = vadd.f32 %v659, 0.04
    %v858 = vadd.f32 %v660, 0.04
    %v859 = vadd.f32 %v661, 0.04
    %v860 = vadd.f32 %v662, 0.04
    %v861 = vadd.f32 %v663, 0.04
    %v862 = vadd.f32 %v664, 0.04
    %v863 = vadd.f32 %v665, 0.04
    %v864 = vrcp.pop %v848
    %v865 = vmul.f32 0.04, %v864
    %v866 = vrcp.pop %v849
    %v867 = vmul.f32 0.04, %v866
    %v868 = vrcp.pop %v850
    %v869 = vmul.f32 0.04, %v868
    %v870 = vrcp.pop %v851
    %v871 = vmul.f32 0.04, %v870
    %v872 = vrcp.pop %v852
    %v873 = vmul.f32 0.04, %v872
    %v874 = vrcp.pop %v853
    %v875 = vmul.f32 0.04, %v874
    %v876 = vrcp.pop %v854
    %v877 = vmul.f32 0.04, %v876
    %v878 = vrcp.pop %v855
    %v879 = vmul.f32 0.04, %v878
    %v880 = vrcp.pop %v856
    %v881 = vmul.f32 0.04, %v880
    %v882 = vrcp.pop %v857
    %v883 = vmul.f32 0.04, %v882
    %v884 = vrcp.pop %v858
    %v885 = vmul.f32 0.04, %v884
    %v886 = vrcp.pop %v859
    %v887 = vmul.f32 0.04, %v886
    %v888 = vrcp.pop %v860
    %v889 = vmul.f32 0.04, %v888
    %v890 = vrcp.pop %v861
    %v891 = vmul.f32 0.04, %v890
    %v892 = vrcp.pop %v862
    %v893 = vmul.f32 0.04, %v892
    %v894 = vrcp.pop %v863
    %v895 = vmul.f32 0.04, %v894
    %v896 = vadd.f32 %v865, 0.0
    %v897 = vadd.f32 %v867, 0.0
    %v898 = vadd.f32 %v869, 0.0
    %v899 = vadd.f32 %v871, 0.0
    %v900 = vadd.f32 %v873, 0.0
    %v901 = vadd.f32 %v875, 0.0
    %v902 = vadd.f32 %v877, 0.0
    %v903 = vadd.f32 %v879, 0.0
    %v904 = vadd.f32 %v881, 0.0
    %v905 = vadd.f32 %v883, 0.0
    %v906 = vadd.f32 %v885, 0.0
    %v907 = vadd.f32 %v887, 0.0
    %v908 = vadd.f32 %v889, 0.0
    %v909 = vadd.f32 %v891, 0.0
    %v910 = vadd.f32 %v893, 0.0
    %v911 = vadd.f32 %v895, 0.0
    %v912 = vadd.f32 %v784, 0.04
    %v913 = vadd.f32 %v785, 0.04
    %v914 = vadd.f32 %v786, 0.04
    %v915 = vadd.f32 %v787, 0.04
    %v916 = vadd.f32 %v788, 0.04
    %v917 = vadd.f32 %v789, 0.04
    %v918 = vadd.f32 %v790, 0.04
    %v919 = vadd.f32 %v791, 0.04
    %v920 = vadd.f32 %v792, 0.04
    %v921 = vadd.f32 %v793, 0.04
    %v922 = vadd.f32 %v794, 0.04
    %v923 = vadd.f32 %v795, 0.04
    %v924 = vadd.f32 %v796, 0.04
    %v925 = vadd.f32 %v797, 0.04
    %v926 = vadd.f32 %v798, 0.04
    %v927 = vadd.f32 %v799, 0.04
    %v928 = vrcp.pop %v912
    %v929 = vmul.f32 0.04, %v928
    %v930 = vrcp.pop %v913
    %v931 = vmul.f32 0.04, %v930
    %v932 = vrcp.pop %v914
    %v933 = vmul.f32 0.04, %v932
    %v934 = vrcp.pop %v915
    %v935 = vmul.f32 0.04, %v934
    %v936 = vrcp.pop %v916
    %v937 = vmul.f32 0.04, %v936
    %v938 = vrcp.pop %v917
    %v939 = vmul.f32 0.04, %v938
    %v940 = vrcp.pop %v918
    %v941 = vmul.f32 0.04, %v940
    %v942 = vrcp.pop %v919
    %v943 = vmul.f32 0.04, %v942
    %v944 = vrcp.pop %v920
    %v945 = vmul.f32 0.04, %v944
    %v946 = vrcp.pop %v921
    %v947 = vmul.f32 0.04, %v946
    %v948 = vrcp.pop %v922
    %v949 = vmul.f32 0.04, %v948
    %v950 = vrcp.pop %v923
    %v951 = vmul.f32 0.04, %v950
    %v952 = vrcp.pop %v924
    %v953 = vmul.f32 0.04, %v952
    %v954 = vrcp.pop %v925
    %v955 = vmul.f32 0.04, %v954
    %v956 = vrcp.pop %v926
    %v957 = vmul.f32 0.04, %v956
    %v958 = vrcp.pop %v927
    %v959 = vmul.f32 0.04, %v958
    %v960 = vadd.f32 %v896, %v929
    %v961 = vadd.f32 %v897, %v931
    %v962 = vadd.f32 %v898, %v933
    %v963 = vadd.f32 %v899, %v935
    %v964 = vadd.f32 %v900, %v937
    %v965 = vadd.f32 %v901, %v939
    %v966 = vadd.f32 %v902, %v941
    %v967 = vadd.f32 %v903, %v943
    %v968 = vadd.f32 %v904, %v945
    %v969 = vadd.f32 %v905, %v947
    %v970 = vadd.f32 %v906, %v949
    %v971 = vadd.f32 %v907, %v951
    %v972 = vadd.f32 %v908, %v953
    %v973 = vadd.f32 %v909, %v955
    %v974 = vadd.f32 %v910, %v957
    %v975 = vadd.f32 %v911, %v959
    %v976 = vadd.f32 %v832, 0.04
    %v977 = vadd.f32 %v833, 0.04
    %v978 = vadd.f32 %v834, 0.04
    %v979 = vadd.f32 %v835, 0.04
    %v980 = vadd.f32 %v836, 0.04
    %v981 = vadd.f32 %v837, 0.04
    %v982 = vadd.f32 %v838, 0.04
    %v983 = vadd.f32 %v839, 0.04
    %v984 = vadd.f32 %v840, 0.04
    %v985 = vadd.f32 %v841, 0.04
    %v986 = vadd.f32 %v842, 0.04
    %v987 = vadd.f32 %v843, 0.04
    %v988 = vadd.f32 %v844, 0.04
    %v989 = vadd.f32 %v845, 0.04
    %v990 = vadd.f32 %v846, 0.04
    %v991 = vadd.f32 %v847, 0.04
    %v992 = vrcp.pop %v976
    %v993 = vmul.f32 0.04, %v992
    %v994 = vrcp.pop %v977
    %v995 = vmul.f32 0.04, %v994
    %v996 = vrcp.pop %v978
    %v997 = vmul.f32 0.04, %v996
    %v998 = vrcp.pop %v979
    %v999 = vmul.f32 0.04, %v998
    %v1000 = vrcp.pop %v980
    %v1001 = vmul.f32 0.04, %v1000
    %v1002 = vrcp.pop %v981
    %v1003 = vmul.f32 0.04, %v1002
    %v1004 = vrcp.pop %v982
    %v1005 = vmul.f32 0.04, %v1004
    %v1006 = vrcp.pop %v983
    %v1007 = vmul.f32 0.04, %v1006
    %v1008 = vrcp.pop %v984
    %v1009 = vmul.f32 0.04, %v1008
    %v1010 = vrcp.pop %v985
    %v1011 = vmul.f32 0.04, %v1010
    %v1012 = vrcp.pop %v986
    %v1013 = vmul.f32 0.04, %v1012
    %v1014 = vrcp.pop %v987
    %v1015 = vmul.f32 0.04, %v1014
    %v1016 = vrcp.pop %v988
    %v1017 = vmul.f32 0.04, %v1016
    %v1018 = vrcp.pop %v989
    %v1019 = vmul.f32 0.04, %v1018
    %v1020 = vrcp.pop %v990
    %v1021 = vmul.f32 0.04, %v1020
    %v1022 = vrcp.pop %v991
    %v1023 = vmul.f32 0.04, %v1022
    %v1024 = vmul.f32 %v993, 2.0
    %v1025 = vmul.f32 %v995, 2.0
    %v1026 = vmul.f32 %v997, 2.0
    %v1027 = vmul.f32 %v999, 2.0
    %v1028 = vmul.f32 %v1001, 2.0
    %v1029 = vmul.f32 %v1003, 2.0
    %v1030 = vmul.f32 %v1005, 2.0
    %v1031 = vmul.f32 %v1007, 2.0
    %v1032 = vmul.f32 %v1009, 2.0
    %v1033 = vmul.f32 %v1011, 2.0
    %v1034 = vmul.f32 %v1013, 2.0
    %v1035 = vmul.f32 %v1015, 2.0
    %v1036 = vmul.f32 %v1017, 2.0
    %v1037 = vmul.f32 %v1019, 2.0
    %v1038 = vmul.f32 %v1021, 2.0
    %v1039 = vmul.f32 %v1023, 2.0
    %v1040 = vsub.f32 %v960, %v1024
    %v1041 = vsub.f32 %v961, %v1025
    %v1042 = vsub.f32 %v962, %v1026
    %v1043 = vsub.f32 %v963, %v1027
    %v1044 = vsub.f32 %v964, %v1028
    %v1045 = vsub.f32 %v965, %v1029
    %v1046 = vsub.f32 %v966, %v1030
    %v1047 = vsub.f32 %v967, %v1031
    %v1048 = vsub.f32 %v968, %v1032
    %v1049 = vsub.f32 %v969, %v1033
    %v1050 = vsub.f32 %v970, %v1034
    %v1051 = vsub.f32 %v971, %v1035
    %v1052 = vsub.f32 %v972, %v1036
    %v1053 = vsub.f32 %v973, %v1037
    %v1054 = vsub.f32 %v974, %v1038
    %v1055 = vsub.f32 %v975, %v1039
    %v1056 = vadd.f32 %v650, 0.25
    %v1057 = vadd.f32 %v651, 0.25
    %v1058 = vadd.f32 %v652, 0.25
    %v1059 = vadd.f32 %v653, 0.25
    %v1060 = vadd.f32 %v654, 0.25
    %v1061 = vadd.f32 %v655, 0.25
    %v1062 = vadd.f32 %v656, 0.25
    %v1063 = vadd.f32 %v657, 0.25
    %v1064 = vadd.f32 %v658, 0.25
    %v1065 = vadd.f32 %v659, 0.25
    %v1066 = vadd.f32 %v660, 0.25
    %v1067 = vadd.f32 %v661, 0.25
    %v1068 = vadd.f32 %v662, 0.25
    %v1069 = vadd.f32 %v663, 0.25
    %v1070 = vadd.f32 %v664, 0.25
    %v1071 = vadd.f32 %v665, 0.25
    %v1072 = vrcp.pop %v1056
    %v1073 = vmul.f32 0.25, %v1072
    %v1074 = vrcp.pop %v1057
    %v1075 = vmul.f32 0.25, %v1074
    %v1076 = vrcp.pop %v1058
    %v1077 = vmul.f32 0.25, %v1076
    %v1078 = vrcp.pop %v1059
    %v1079 = vmul.f32 0.25, %v1078
    %v1080 = vrcp.pop %v1060
    %v1081 = vmul.f32 0.25, %v1080
    %v1082 = vrcp.pop %v1061
    %v1083 = vmul.f32 0.25, %v1082
    %v1084 = vrcp.pop %v1062
    %v1085 = vmul.f32 0.25, %v1084
    %v1086 = vrcp.pop %v1063
    %v1087 = vmul.f32 0.25, %v1086
    %v1088 = vrcp.pop %v1064
    %v1089 = vmul.f32 0.25, %v1088
    %v1090 = vrcp.pop %v1065
    %v1091 = vmul.f32 0.25, %v1090
    %v1092 = vrcp.pop %v1066
    %v1093 = vmul.f32 0.25, %v1092
    %v1094 = vrcp.pop %v1067
    %v1095 = vmul.f32 0.25, %v1094
    %v1096 = vrcp.pop %v1068
    %v1097 = vmul.f32 0.25, %v1096
    %v1098 = vrcp.pop %v1069
    %v1099 = vmul.f32 0.25, %v1098
    %v1100 = vrcp.pop %v1070
    %v1101 = vmul.f32 0.25, %v1100
    %v1102 = vrcp.pop %v1071
    %v1103 = vmul.f32 0.25, %v1102
    %v1104 = vadd.f32 %v1040, %v1073
    %v1105 = vadd.f32 %v1041, %v1075
    %v1106 = vadd.f32 %v1042, %v1077
    %v1107 = vadd.f32 %v1043, %v1079
    %v1108 = vadd.f32 %v1044, %v1081
    %v1109 = vadd.f32 %v1045, %v1083
    %v1110 = vadd.f32 %v1046, %v1085
    %v1111 = vadd.f32 %v1047, %v1087
    %v1112 = vadd.f32 %v1048, %v1089
    %v1113 = vadd.f32 %v1049, %v1091
    %v1114 = vadd.f32 %v1050, %v1093
    %v1115 = vadd.f32 %v1051, %v1095
    %v1116 = vadd.f32 %v1052, %v1097
    %v1117 = vadd.f32 %v1053, %v1099
    %v1118 = vadd.f32 %v1054, %v1101
    %v1119 = vadd.f32 %v1055, %v1103
    %v1120 = vadd.f32 %v784, 0.25
    %v1121 = vadd.f32 %v785, 0.25
    %v1122 = vadd.f32 %v786, 0.25
    %v1123 = vadd.f32 %v787, 0.25
    %v1124 = vadd.f32 %v788, 0.25
    %v1125 = vadd.f32 %v789, 0.25
    %v1126 = vadd.f32 %v790, 0.25
    %v1127 = vadd.f32 %v791, 0.25
    %v1128 = vadd.f32 %v792, 0.25
    %v1129 = vadd.f32 %v793, 0.25
    %v1130 = vadd.f32 %v794, 0.25
    %v1131 = vadd.f32 %v795, 0.25
    %v1132 = vadd.f32 %v796, 0.25
    %v1133 = vadd.f32 %v797, 0.25
    %v1134 = vadd.f32 %v798, 0.25
    %v1135 = vadd.f32 %v799, 0.25
    %v1136 = vrcp.pop %v1120
    %v1137 = vmul.f32 0.25, %v1136
    %v1138 = vrcp.pop %v1121
    %v1139 = vmul.f32 0.25, %v1138
    %v1140 = vrcp.pop %v1122
    %v1141 = vmul.f32 0.25, %v1140
    %v1142 = vrcp.pop %v1123
    %v1143 = vmul.f32 0.25, %v1142
    %v1144 = vrcp.pop %v1124
    %v1145 = vmul.f32 0.25, %v1144
    %v1146 = vrcp.pop %v1125
    %v1147 = vmul.f32 0.25, %v1146
    %v1148 = vrcp.pop %v1126
    %v1149 = vmul.f32 0.25, %v1148
    %v1150 = vrcp.pop %v1127
    %v1151 = vmul.f32 0.25, %v1150
    %v1152 = vrcp.pop %v1128
    %v1153 = vmul.f32 0.25, %v1152
    %v1154 = vrcp.pop %v1129
    %v1155 = vmul.f32 0.25, %v1154
    %v1156 = vrcp.pop %v1130
    %v1157 = vmul.f32 0.25, %v1156
    %v1158 = vrcp.pop %v1131
    %v1159 = vmul.f32 0.25, %v1158
    %v1160 = vrcp.pop %v1132
    %v1161 = vmul.f32 0.25, %v1160
    %v1162 = vrcp.pop %v1133
    %v1163 = vmul.f32 0.25, %v1162
    %v1164 = vrcp.pop %v1134
    %v1165 = vmul.f32 0.25, %v1164
    %v1166 = vrcp.pop %v1135
    %v1167 = vmul.f32 0.25, %v1166
    %v1168 = vadd.f32 %v1104, %v1137
    %v1169 = vadd.f32 %v1105, %v1139
    %v1170 = vadd.f32 %v1106, %v1141
    %v1171 = vadd.f32 %v1107, %v1143
    %v1172 = vadd.f32 %v1108, %v1145
    %v1173 = vadd.f32 %v1109, %v1147
    %v1174 = vadd.f32 %v1110, %v1149
    %v1175 = vadd.f32 %v1111, %v1151
    %v1176 = vadd.f32 %v1112, %v1153
    %v1177 = vadd.f32 %v1113, %v1155
    %v1178 = vadd.f32 %v1114, %v1157
    %v1179 = vadd.f32 %v1115, %v1159
    %v1180 = vadd.f32 %v1116, %v1161
    %v1181 = vadd.f32 %v1117, %v1163
    %v1182 = vadd.f32 %v1118, %v1165
    %v1183 = vadd.f32 %v1119, %v1167
    %v1184 = vadd.f32 %v832, 0.25
    %v1185 = vadd.f32 %v833, 0.25
    %v1186 = vadd.f32 %v834, 0.25
    %v1187 = vadd.f32 %v835, 0.25
    %v1188 = vadd.f32 %v836, 0.25
    %v1189 = vadd.f32 %v837, 0.25
    %v1190 = vadd.f32 %v838, 0.25
    %v1191 = vadd.f32 %v839, 0.25
    %v1192 = vadd.f32 %v840, 0.25
    %v1193 = vadd.f32 %v841, 0.25
    %v1194 = vadd.f32 %v842, 0.25
    %v1195 = vadd.f32 %v843, 0.25
    %v1196 = vadd.f32 %v844, 0.25
    %v1197 = vadd.f32 %v845, 0.25
    %v1198 = vadd.f32 %v846, 0.25
    %v1199 = vadd.f32 %v847, 0.25
    %v1200 = vrcp.pop %v1184
    %v1201 = vmul.f32 0.25, %v1200
    %v1202 = vrcp.pop %v1185
    %v1203 = vmul.f32 0.25, %v1202
    %v1204 = vrcp.pop %v1186
    %v1205 = vmul.f32 0.25, %v1204
    %v1206 = vrcp.pop %v1187
    %v1207 = vmul.f32 0.25, %v1206
    %v1208 = vrcp.pop %v1188
    %v1209 = vmul.f32 0.25, %v1208
    %v1210 = vrcp.pop %v1189
    %v1211 = vmul.f32 0.25, %v1210
    %v1212 = vrcp.pop %v1190
    %v1213 = vmul.f32 0.25, %v1212
    %v1214 = vrcp.pop %v1191
    %v1215 = vmul.f32 0.25, %v1214
    %v1216 = vrcp.pop %v1192
    %v1217 = vmul.f32 0.25, %v1216
    %v1218 = vrcp.pop %v1193
    %v1219 = vmul.f32 0.25, %v1218
    %v1220 = vrcp.pop %v1194
    %v1221 = vmul.f32 0.25, %v1220
    %v1222 = vrcp.pop %v1195
    %v1223 = vmul.f32 0.25, %v1222
    %v1224 = vrcp.pop %v1196
    %v1225 = vmul.f32 0.25, %v1224
    %v1226 = vrcp.pop %v1197
    %v1227 = vmul.f32 0.25, %v1226
    %v1228 = vrcp.pop %v1198
    %v1229 = vmul.f32 0.25, %v1228
    %v1230 = vrcp.pop %v1199
    %v1231 = vmul.f32 0.25, %v1230
    %v1232 = vmul.f32 %v1201, 2.0
    %v1233 = vmul.f32 %v1203, 2.0
    %v1234 = vmul.f32 %v1205, 2.0
    %v1235 = vmul.f32 %v1207, 2.0
    %v1236 = vmul.f32 %v1209, 2.0
    %v1237 = vmul.f32 %v1211, 2.0
    %v1238 = vmul.f32 %v1213, 2.0
    %v1239 = vmul.f32 %v1215, 2.0
    %v1240 = vmul.f32 %v1217, 2.0
    %v1241 = vmul.f32 %v1219, 2.0
    %v1242 = vmul.f32 %v1221, 2.0
    %v1243 = vmul.f32 %v1223, 2.0
    %v1244 = vmul.f32 %v1225, 2.0
    %v1245 = vmul.f32 %v1227, 2.0
    %v1246 = vmul.f32 %v1229, 2.0
    %v1247 = vmul.f32 %v1231, 2.0
    %v1248 = vsub.f32 %v1168, %v1232
    %v1249 = vsub.f32 %v1169, %v1233
    %v1250 = vsub.f32 %v1170, %v1234
    %v1251 = vsub.f32 %v1171, %v1235
    %v1252 = vsub.f32 %v1172, %v1236
    %v1253 = vsub.f32 %v1173, %v1237
    %v1254 = vsub.f32 %v1174, %v1238
    %v1255 = vsub.f32 %v1175, %v1239
    %v1256 = vsub.f32 %v1176, %v1240
    %v1257 = vsub.f32 %v1177, %v1241
    %v1258 = vsub.f32 %v1178, %v1242
    %v1259 = vsub.f32 %v1179, %v1243
    %v1260 = vsub.f32 %v1180, %v1244
    %v1261 = vsub.f32 %v1181, %v1245
    %v1262 = vsub.f32 %v1182, %v1246
    %v1263 = vsub.f32 %v1183, %v1247
    %v1264 = vadd.f32 %v650, 0.81
    %v1265 = vadd.f32 %v651, 0.81
    %v1266 = vadd.f32 %v652, 0.81
    %v1267 = vadd.f32 %v653, 0.81
    %v1268 = vadd.f32 %v654, 0.81
    %v1269 = vadd.f32 %v655, 0.81
    %v1270 = vadd.f32 %v656, 0.81
    %v1271 = vadd.f32 %v657, 0.81
    %v1272 = vadd.f32 %v658, 0.81
    %v1273 = vadd.f32 %v659, 0.81
    %v1274 = vadd.f32 %v660, 0.81
    %v1275 = vadd.f32 %v661, 0.81
    %v1276 = vadd.f32 %v662, 0.81
    %v1277 = vadd.f32 %v663, 0.81
    %v1278 = vadd.f32 %v664, 0.81
    %v1279 = vadd.f32 %v665, 0.81
    %v1280 = vrcp.pop %v1264
    %v1281 = vmul.f32 0.81, %v1280
    %v1282 = vrcp.pop %v1265
    %v1283 = vmul.f32 0.81, %v1282
    %v1284 = vrcp.pop %v1266
    %v1285 = vmul.f32 0.81, %v1284
    %v1286 = vrcp.pop %v1267
    %v1287 = vmul.f32 0.81, %v1286
    %v1288 = vrcp.pop %v1268
    %v1289 = vmul.f32 0.81, %v1288
    %v1290 = vrcp.pop %v1269
    %v1291 = vmul.f32 0.81, %v1290
    %v1292 = vrcp.pop %v1270
    %v1293 = vmul.f32 0.81, %v1292
    %v1294 = vrcp.pop %v1271
    %v1295 = vmul.f32 0.81, %v1294
    %v1296 = vrcp.pop %v1272
    %v1297 = vmul.f32 0.81, %v1296
    %v1298 = vrcp.pop %v1273
    %v1299 = vmul.f32 0.81, %v1298
    %v1300 = vrcp.pop %v1274
    %v1301 = vmul.f32 0.81, %v1300
    %v1302 = vrcp.pop %v1275
    %v1303 = vmul.f32 0.81, %v1302
    %v1304 = vrcp.pop %v1276
    %v1305 = vmul.f32 0.81, %v1304
    %v1306 = vrcp.pop %v1277
    %v1307 = vmul.f32 0.81, %v1306
    %v1308 = vrcp.pop %v1278
    %v1309 = vmul.f32 0.81, %v1308
    %v1310 = vrcp.pop %v1279
    %v1311 = vmul.f32 0.81, %v1310
    %v1312 = vadd.f32 %v1248, %v1281
    %v1313 = vadd.f32 %v1249, %v1283
    %v1314 = vadd.f32 %v1250, %v1285
    %v1315 = vadd.f32 %v1251, %v1287
    %v1316 = vadd.f32 %v1252, %v1289
    %v1317 = vadd.f32 %v1253, %v1291
    %v1318 = vadd.f32 %v1254, %v1293
    %v1319 = vadd.f32 %v1255, %v1295
    %v1320 = vadd.f32 %v1256, %v1297
    %v1321 = vadd.f32 %v1257, %v1299
    %v1322 = vadd.f32 %v1258, %v1301
    %v1323 = vadd.f32 %v1259, %v1303
    %v1324 = vadd.f32 %v1260, %v1305
    %v1325 = vadd.f32 %v1261, %v1307
    %v1326 = vadd.f32 %v1262, %v1309
    %v1327 = vadd.f32 %v1263, %v1311
    %v1328 = vadd.f32 %v784, 0.81
    %v1329 = vadd.f32 %v785, 0.81
    %v1330 = vadd.f32 %v786, 0.81
    %v1331 = vadd.f32 %v787, 0.81
    %v1332 = vadd.f32 %v788, 0.81
    %v1333 = vadd.f32 %v789, 0.81
    %v1334 = vadd.f32 %v790, 0.81
    %v1335 = vadd.f32 %v791, 0.81
    %v1336 = vadd.f32 %v792, 0.81
    %v1337 = vadd.f32 %v793, 0.81
    %v1338 = vadd.f32 %v794, 0.81
    %v1339 = vadd.f32 %v795, 0.81
    %v1340 = vadd.f32 %v796, 0.81
    %v1341 = vadd.f32 %v797, 0.81
    %v1342 = vadd.f32 %v798, 0.81
    %v1343 = vadd.f32 %v799, 0.81
    %v1344 = vrcp.pop %v1328
    %v1345 = vmul.f32 0.81, %v1344
    %v1346 = vrcp.pop %v1329
    %v1347 = vmul.f32 0.81, %v1346
    %v1348 = vrcp.pop %v1330
    %v1349 = vmul.f32 0.81, %v1348
    %v1350 = vrcp.pop %v1331
    %v1351 = vmul.f32 0.81, %v1350
    %v1352 = vrcp.pop %v1332
    %v1353 = vmul.f32 0.81, %v1352
    %v1354 = vrcp.pop %v1333
    %v1355 = vmul.f32 0.81, %v1354
    %v1356 = vrcp.pop %v1334
    %v1357 = vmul.f32 0.81, %v1356
    %v1358 = vrcp.pop %v1335
    %v1359 = vmul.f32 0.81, %v1358
    %v1360 = vrcp.pop %v1336
    %v1361 = vmul.f32 0.81, %v1360
    %v1362 = vrcp.pop %v1337
    %v1363 = vmul.f32 0.81, %v1362
    %v1364 = vrcp.pop %v1338
    %v1365 = vmul.f32 0.81, %v1364
    %v1366 = vrcp.pop %v1339
    %v1367 = vmul.f32 0.81, %v1366
    %v1368 = vrcp.pop %v1340
    %v1369 = vmul.f32 0.81, %v1368
    %v1370 = vrcp.pop %v1341
    %v1371 = vmul.f32 0.81, %v1370
    %v1372 = vrcp.pop %v1342
    %v1373 = vmul.f32 0.81, %v1372
    %v1374 = vrcp.pop %v1343
    %v1375 = vmul.f32 0.81, %v1374
    %v1376 = vadd.f32 %v1312, %v1345
    %v1377 = vadd.f32 %v1313, %v1347
    %v1378 = vadd.f32 %v1314, %v1349
    %v1379 = vadd.f32 %v1315, %v1351
    %v1380 = vadd.f32 %v1316, %v1353
    %v1381 = vadd.f32 %v1317, %v1355
    %v1382 = vadd.f32 %v1318, %v1357
    %v1383 = vadd.f32 %v1319, %v1359
    %v1384 = vadd.f32 %v1320, %v1361
    %v1385 = vadd.f32 %v1321, %v1363
    %v1386 = vadd.f32 %v1322, %v1365
    %v1387 = vadd.f32 %v1323, %v1367
    %v1388 = vadd.f32 %v1324, %v1369
    %v1389 = vadd.f32 %v1325, %v1371
    %v1390 = vadd.f32 %v1326, %v1373
    %v1391 = vadd.f32 %v1327, %v1375
    %v1392 = vadd.f32 %v832, 0.81
    %v1393 = vadd.f32 %v833, 0.81
    %v1394 = vadd.f32 %v834, 0.81
    %v1395 = vadd.f32 %v835, 0.81
    %v1396 = vadd.f32 %v836, 0.81
    %v1397 = vadd.f32 %v837, 0.81
    %v1398 = vadd.f32 %v838, 0.81
    %v1399 = vadd.f32 %v839, 0.81
    %v1400 = vadd.f32 %v840, 0.81
    %v1401 = vadd.f32 %v841, 0.81
    %v1402 = vadd.f32 %v842, 0.81
    %v1403 = vadd.f32 %v843, 0.81
    %v1404 = vadd.f32 %v844, 0.81
    %v1405 = vadd.f32 %v845, 0.81
    %v1406 = vadd.f32 %v846, 0.81
    %v1407 = vadd.f32 %v847, 0.81
    %v1408 = vrcp.pop %v1392
    %v1409 = vmul.f32 0.81, %v1408
    %v1410 = vrcp.pop %v1393
    %v1411 = vmul.f32 0.81, %v1410
    %v1412 = vrcp.pop %v1394
    %v1413 = vmul.f32 0.81, %v1412
    %v1414 = vrcp.pop %v1395
    %v1415 = vmul.f32 0.81, %v1414
    %v1416 = vrcp.pop %v1396
    %v1417 = vmul.f32 0.81, %v1416
    %v1418 = vrcp.pop %v1397
    %v1419 = vmul.f32 0.81, %v1418
    %v1420 = vrcp.pop %v1398
    %v1421 = vmul.f32 0.81, %v1420
    %v1422 = vrcp.pop %v1399
    %v1423 = vmul.f32 0.81, %v1422
    %v1424 = vrcp.pop %v1400
    %v1425 = vmul.f32 0.81, %v1424
    %v1426 = vrcp.pop %v1401
    %v1427 = vmul.f32 0.81, %v1426
    %v1428 = vrcp.pop %v1402
    %v1429 = vmul.f32 0.81, %v1428
    %v1430 = vrcp.pop %v1403
    %v1431 = vmul.f32 0.81, %v1430
    %v1432 = vrcp.pop %v1404
    %v1433 = vmul.f32 0.81, %v1432
    %v1434 = vrcp.pop %v1405
    %v1435 = vmul.f32 0.81, %v1434
    %v1436 = vrcp.pop %v1406
    %v1437 = vmul.f32 0.81, %v1436
    %v1438 = vrcp.pop %v1407
    %v1439 = vmul.f32 0.81, %v1438
    %v1440 = vmul.f32 %v1409, 2.0
    %v1441 = vmul.f32 %v1411, 2.0
    %v1442 = vmul.f32 %v1413, 2.0
    %v1443 = vmul.f32 %v1415, 2.0
    %v1444 = vmul.f32 %v1417, 2.0
    %v1445 = vmul.f32 %v1419, 2.0
    %v1446 = vmul.f32 %v1421, 2.0
    %v1447 = vmul.f32 %v1423, 2.0
    %v1448 = vmul.f32 %v1425, 2.0
    %v1449 = vmul.f32 %v1427, 2.0
    %v1450 = vmul.f32 %v1429, 2.0
    %v1451 = vmul.f32 %v1431, 2.0
    %v1452 = vmul.f32 %v1433, 2.0
    %v1453 = vmul.f32 %v1435, 2.0
    %v1454 = vmul.f32 %v1437, 2.0
    %v1455 = vmul.f32 %v1439, 2.0
    %v1456 = vsub.f32 %v1376, %v1440
    %v1457 = vsub.f32 %v1377, %v1441
    %v1458 = vsub.f32 %v1378, %v1442
    %v1459 = vsub.f32 %v1379, %v1443
    %v1460 = vsub.f32 %v1380, %v1444
    %v1461 = vsub.f32 %v1381, %v1445
    %v1462 = vsub.f32 %v1382, %v1446
    %v1463 = vsub.f32 %v1383, %v1447
    %v1464 = vsub.f32 %v1384, %v1448
    %v1465 = vsub.f32 %v1385, %v1449
    %v1466 = vsub.f32 %v1386, %v1450
    %v1467 = vsub.f32 %v1387, %v1451
    %v1468 = vsub.f32 %v1388, %v1452
    %v1469 = vsub.f32 %v1389, %v1453
    %v1470 = vsub.f32 %v1390, %v1454
    %v1471 = vsub.f32 %v1391, %v1455
    %v1472 = vadd.f32 %v650, 1.69
    %v1473 = vadd.f32 %v651, 1.69
    %v1474 = vadd.f32 %v652, 1.69
    %v1475 = vadd.f32 %v653, 1.69
    %v1476 = vadd.f32 %v654, 1.69
    %v1477 = vadd.f32 %v655, 1.69
    %v1478 = vadd.f32 %v656, 1.69
    %v1479 = vadd.f32 %v657, 1.69
    %v1480 = vadd.f32 %v658, 1.69
    %v1481 = vadd.f32 %v659, 1.69
    %v1482 = vadd.f32 %v660, 1.69
    %v1483 = vadd.f32 %v661, 1.69
    %v1484 = vadd.f32 %v662, 1.69
    %v1485 = vadd.f32 %v663, 1.69
    %v1486 = vadd.f32 %v664, 1.69
    %v1487 = vadd.f32 %v665, 1.69
    %v1488 = vrcp.pop %v1472
    %v1489 = vmul.f32 1.69, %v1488
    %v1490 = vrcp.pop %v1473
    %v1491 = vmul.f32 1.69, %v1490
    %v1492 = vrcp.pop %v1474
    %v1493 = vmul.f32 1.69, %v1492
    %v1494 = vrcp.pop %v1475
    %v1495 = vmul.f32 1.69, %v1494
    %v1496 = vrcp.pop %v1476
    %v1497 = vmul.f32 1.69, %v1496
    %v1498 = vrcp.pop %v1477
    %v1499 = vmul.f32 1.69, %v1498
    %v1500 = vrcp.pop %v1478
    %v1501 = vmul.f32 1.69, %v1500
    %v1502 = vrcp.pop %v1479
    %v1503 = vmul.f32 1.69, %v1502
    %v1504 = vrcp.pop %v1480
    %v1505 = vmul.f32 1.69, %v1504
    %v1506 = vrcp.pop %v1481
    %v1507 = vmul.f32 1.69, %v1506
    %v1508 = vrcp.pop %v1482
    %v1509 = vmul.f32 1.69, %v1508
    %v1510 = vrcp.pop %v1483
    %v1511 = vmul.f32 1.69, %v1510
    %v1512 = vrcp.pop %v1484
    %v1513 = vmul.f32 1.69, %v1512
    %v1514 = vrcp.pop %v1485
    %v1515 = vmul.f32 1.69, %v1514
    %v1516 = vrcp.pop %v1486
    %v1517 = vmul.f32 1.69, %v1516
    %v1518 = vrcp.pop %v1487
    %v1519 = vmul.f32 1.69, %v1518
    %v1520 = vadd.f32 %v1456, %v1489
    %v1521 = vadd.f32 %v1457, %v1491
    %v1522 = vadd.f32 %v1458, %v1493
    %v1523 = vadd.f32 %v1459, %v1495
    %v1524 = vadd.f32 %v1460, %v1497
    %v1525 = vadd.f32 %v1461, %v1499
    %v1526 = vadd.f32 %v1462, %v1501
    %v1527 = vadd.f32 %v1463, %v1503
    %v1528 = vadd.f32 %v1464, %v1505
    %v1529 = vadd.f32 %v1465, %v1507
    %v1530 = vadd.f32 %v1466, %v1509
    %v1531 = vadd.f32 %v1467, %v1511
    %v1532 = vadd.f32 %v1468, %v1513
    %v1533 = vadd.f32 %v1469, %v1515
    %v1534 = vadd.f32 %v1470, %v1517
    %v1535 = vadd.f32 %v1471, %v1519
    %v1536 = vadd.f32 %v784, 1.69
    %v1537 = vadd.f32 %v785, 1.69
    %v1538 = vadd.f32 %v786, 1.69
    %v1539 = vadd.f32 %v787, 1.69
    %v1540 = vadd.f32 %v788, 1.69
    %v1541 = vadd.f32 %v789, 1.69
    %v1542 = vadd.f32 %v790, 1.69
    %v1543 = vadd.f32 %v791, 1.69
    %v1544 = vadd.f32 %v792, 1.69
    %v1545 = vadd.f32 %v793, 1.69
    %v1546 = vadd.f32 %v794, 1.69
    %v1547 = vadd.f32 %v795, 1.69
    %v1548 = vadd.f32 %v796, 1.69
    %v1549 = vadd.f32 %v797, 1.69
    %v1550 = vadd.f32 %v798, 1.69
    %v1551 = vadd.f32 %v799, 1.69
    %v1552 = vrcp.pop %v1536
    %v1553 = vmul.f32 1.69, %v1552
    %v1554 = vrcp.pop %v1537
    %v1555 = vmul.f32 1.69, %v1554
    %v1556 = vrcp.pop %v1538
    %v1557 = vmul.f32 1.69, %v1556
    %v1558 = vrcp.pop %v1539
    %v1559 = vmul.f32 1.69, %v1558
    %v1560 = vrcp.pop %v1540
    %v1561 = vmul.f32 1.69, %v1560
    %v1562 = vrcp.pop %v1541
    %v1563 = vmul.f32 1.69, %v1562
    %v1564 = vrcp.pop %v1542
    %v1565 = vmul.f32 1.69, %v1564
    %v1566 = vrcp.pop %v1543
    %v1567 = vmul.f32 1.69, %v1566
    %v1568 = vrcp.pop %v1544
    %v1569 = vmul.f32 1.69, %v1568
    %v1570 = vrcp.pop %v1545
    %v1571 = vmul.f32 1.69, %v1570
    %v1572 = vrcp.pop %v1546
    %v1573 = vmul.f32 1.69, %v1572
    %v1574 = vrcp.pop %v1547
    %v1575 = vmul.f32 1.69, %v1574
    %v1576 = vrcp.pop %v1548
    %v1577 = vmul.f32 1.69, %v1576
    %v1578 = vrcp.pop %v1549
    %v1579 = vmul.f32 1.69, %v1578
    %v1580 = vrcp.pop %v1550
    %v1581 = vmul.f32 1.69, %v1580
    %v1582 = vrcp.pop %v1551
    %v1583 = vmul.f32 1.69, %v1582
    %v1584 = vadd.f32 %v1520, %v1553
    %v1585 = vadd.f32 %v1521, %v1555
    %v1586 = vadd.f32 %v1522, %v1557
    %v1587 = vadd.f32 %v1523, %v1559
    %v1588 = vadd.f32 %v1524, %v1561
    %v1589 = vadd.f32 %v1525, %v1563
    %v1590 = vadd.f32 %v1526, %v1565
    %v1591 = vadd.f32 %v1527, %v1567
    %v1592 = vadd.f32 %v1528, %v1569
    %v1593 = vadd.f32 %v1529, %v1571
    %v1594 = vadd.f32 %v1530, %v1573
    %v1595 = vadd.f32 %v1531, %v1575
    %v1596 = vadd.f32 %v1532, %v1577
    %v1597 = vadd.f32 %v1533, %v1579
    %v1598 = vadd.f32 %v1534, %v1581
    %v1599 = vadd.f32 %v1535, %v1583
    %v1600 = vadd.f32 %v832, 1.69
    %v1601 = vadd.f32 %v833, 1.69
    %v1602 = vadd.f32 %v834, 1.69
    %v1603 = vadd.f32 %v835, 1.69
    %v1604 = vadd.f32 %v836, 1.69
    %v1605 = vadd.f32 %v837, 1.69
    %v1606 = vadd.f32 %v838, 1.69
    %v1607 = vadd.f32 %v839, 1.69
    %v1608 = vadd.f32 %v840, 1.69
    %v1609 = vadd.f32 %v841, 1.69
    %v1610 = vadd.f32 %v842, 1.69
    %v1611 = vadd.f32 %v843, 1.69
    %v1612 = vadd.f32 %v844, 1.69
    %v1613 = vadd.f32 %v845, 1.69
    %v1614 = vadd.f32 %v846, 1.69
    %v1615 = vadd.f32 %v847, 1.69
    %v1616 = vrcp.pop %v1600
    %v1617 = vmul.f32 1.69, %v1616
    %v1618 = vrcp.pop %v1601
    %v1619 = vmul.f32 1.69, %v1618
    %v1620 = vrcp.pop %v1602
    %v1621 = vmul.f32 1.69, %v1620
    %v1622 = vrcp.pop %v1603
    %v1623 = vmul.f32 1.69, %v1622
    %v1624 = vrcp.pop %v1604
    %v1625 = vmul.f32 1.69, %v1624
    %v1626 = vrcp.pop %v1605
    %v1627 = vmul.f32 1.69, %v1626
    %v1628 = vrcp.pop %v1606
    %v1629 = vmul.f32 1.69, %v1628
    %v1630 = vrcp.pop %v1607
    %v1631 = vmul.f32 1.69, %v1630
    %v1632 = vrcp.pop %v1608
    %v1633 = vmul.f32 1.69, %v1632
    %v1634 = vrcp.pop %v1609
    %v1635 = vmul.f32 1.69, %v1634
    %v1636 = vrcp.pop %v1610
    %v1637 = vmul.f32 1.69, %v1636
    %v1638 = vrcp.pop %v1611
    %v1639 = vmul.f32 1.69, %v1638
    %v1640 = vrcp.pop %v1612
    %v1641 = vmul.f32 1.69, %v1640
    %v1642 = vrcp.pop %v1613
    %v1643 = vmul.f32 1.69, %v1642
    %v1644 = vrcp.pop %v1614
    %v1645 = vmul.f32 1.69, %v1644
    %v1646 = vrcp.pop %v1615
    %v1647 = vmul.f32 1.69, %v1646
    %v1648 = vmul.f32 %v1617, 2.0
    %v1649 = vmul.f32 %v1619, 2.0
    %v1650 = vmul.f32 %v1621, 2.0
    %v1651 = vmul.f32 %v1623, 2.0
    %v1652 = vmul.f32 %v1625, 2.0
    %v1653 = vmul.f32 %v1627, 2.0
    %v1654 = vmul.f32 %v1629, 2.0
    %v1655 = vmul.f32 %v1631, 2.0
    %v1656 = vmul.f32 %v1633, 2.0
    %v1657 = vmul.f32 %v1635, 2.0
    %v1658 = vmul.f32 %v1637, 2.0
    %v1659 = vmul.f32 %v1639, 2.0
    %v1660 = vmul.f32 %v1641, 2.0
    %v1661 = vmul.f32 %v1643, 2.0
    %v1662 = vmul.f32 %v1645, 2.0
    %v1663 = vmul.f32 %v1647, 2.0
    %v1664 = vsub.f32 %v1584, %v1648
    %v1665 = vsub.f32 %v1585, %v1649
    %v1666 = vsub.f32 %v1586, %v1650
    %v1667 = vsub.f32 %v1587, %v1651
    %v1668 = vsub.f32 %v1588, %v1652
    %v1669 = vsub.f32 %v1589, %v1653
    %v1670 = vsub.f32 %v1590, %v1654
    %v1671 = vsub.f32 %v1591, %v1655
    %v1672 = vsub.f32 %v1592, %v1656
    %v1673 = vsub.f32 %v1593, %v1657
    %v1674 = vsub.f32 %v1594, %v1658
    %v1675 = vsub.f32 %v1595, %v1659
    %v1676 = vsub.f32 %v1596, %v1660
    %v1677 = vsub.f32 %v1597, %v1661
    %v1678 = vsub.f32 %v1598, %v1662
    %v1679 = vsub.f32 %v1599, %v1663
    %v1680 = vlaneseq
    %v1681 = vshrl.u32 %v1680, 7
    %v1682 = vadd.s32 %v1681, 8
    %v1683 = vadd.s32 %v1681, 16
    %v1684 = vadd.s32 %v1681, 24
    %v1685 = vadd.s32 %v1681, 32
    %v1686 = vadd.s32 %v1681, 40
    %v1687 = vadd.s32 %v1681, 48
    %v1688 = vadd.s32 %v1681, 56
    %v1689 = vadd.s32 %v1681, 64
    %v1690 = vadd.s32 %v1681, 72
    %v1691 = vadd.s32 %v1681, 80
    %v1692 = vadd.s32 %v1681, 88
    %v1693 = vadd.s32 %v1681, 96
    %v1694 = vadd.s32 %v1681, 104
    %v1695 = vadd.s32 %v1681, 112
    %v1696 = vadd.s32 %v1681, 120
    %s1697 = smul.u32 0, 128
    %v1698 = vstv %s1697
    %v1699 = vadd.s32 %v1681, %v1698
    %v1700 = vadd.s32 %v1682, %v1698
    %v1701 = vadd.s32 %v1683, %v1698
    %v1702 = vadd.s32 %v1684, %v1698
    %v1703 = vadd.s32 %v1685, %v1698
    %v1704 = vadd.s32 %v1686, %v1698
    %v1705 = vadd.s32 %v1687, %v1698
    %v1706 = vadd.s32 %v1688, %v1698
    %v1707 = vadd.s32 %v1689, %v1698
    %v1708 = vadd.s32 %v1690, %v1698
    %v1709 = vadd.s32 %v1691, %v1698
    %v1710 = vadd.s32 %v1692, %v1698
    %v1711 = vadd.s32 %v1693, %v1698
    %v1712 = vadd.s32 %v1694, %v1698
    %v1713 = vadd.s32 %v1695, %v1698
    %v1714 = vadd.s32 %v1696, %v1698
    %v1715 = vlaneseq
    %v1716 = vand.u32 %v1715, 127
    %s1717 = smul.u32 0, 128
    %v1718 = vstv %s1717
    %v1719 = vadd.s32 %v1716, %v1718
    %vm1720 = vcmp.lt.s32.totalorder %v1699, 8
    %vm1721 = vcmp.lt.s32.totalorder %v1700, 8
    %vm1722 = vcmp.lt.s32.totalorder %v1701, 8
    %vm1723 = vcmp.lt.s32.totalorder %v1702, 8
    %vm1724 = vcmp.lt.s32.totalorder %v1703, 8
    %vm1725 = vcmp.lt.s32.totalorder %v1704, 8
    %vm1726 = vcmp.lt.s32.totalorder %v1705, 8
    %vm1727 = vcmp.lt.s32.totalorder %v1706, 8
    %vm1728 = vcmp.lt.s32.totalorder %v1707, 8
    %vm1729 = vcmp.lt.s32.totalorder %v1708, 8
    %vm1730 = vcmp.lt.s32.totalorder %v1709, 8
    %vm1731 = vcmp.lt.s32.totalorder %v1710, 8
    %vm1732 = vcmp.lt.s32.totalorder %v1711, 8
    %vm1733 = vcmp.lt.s32.totalorder %v1712, 8
    %vm1734 = vcmp.lt.s32.totalorder %v1713, 8
    %vm1735 = vcmp.lt.s32.totalorder %v1714, 8
    %vm1736 = vcmp.lt.s32.totalorder %v1719, 8
    %vm1737 = vmand %vm1720, %vm1736
    %vm1738 = vmand %vm1721, %vm1736
    %vm1739 = vmand %vm1722, %vm1736
    %vm1740 = vmand %vm1723, %vm1736
    %vm1741 = vmand %vm1724, %vm1736
    %vm1742 = vmand %vm1725, %vm1736
    %vm1743 = vmand %vm1726, %vm1736
    %vm1744 = vmand %vm1727, %vm1736
    %vm1745 = vmand %vm1728, %vm1736
    %vm1746 = vmand %vm1729, %vm1736
    %vm1747 = vmand %vm1730, %vm1736
    %vm1748 = vmand %vm1731, %vm1736
    %vm1749 = vmand %vm1732, %vm1736
    %vm1750 = vmand %vm1733, %vm1736
    %vm1751 = vmand %vm1734, %vm1736
    %vm1752 = vmand %vm1735, %vm1736
    %v1753 = vsel %vm1737, %v1664, 0.0
    %v1754 = vsel %vm1738, %v1665, 0.0
    %v1755 = vsel %vm1739, %v1666, 0.0
    %v1756 = vsel %vm1740, %v1667, 0.0
    %v1757 = vsel %vm1741, %v1668, 0.0
    %v1758 = vsel %vm1742, %v1669, 0.0
    %v1759 = vsel %vm1743, %v1670, 0.0
    %v1760 = vsel %vm1744, %v1671, 0.0
    %v1761 = vsel %vm1745, %v1672, 0.0
    %v1762 = vsel %vm1746, %v1673, 0.0
    %v1763 = vsel %vm1747, %v1674, 0.0
    %v1764 = vsel %vm1748, %v1675, 0.0
    %v1765 = vsel %vm1749, %v1676, 0.0
    %v1766 = vsel %vm1750, %v1677, 0.0
    %v1767 = vsel %vm1751, %v1678, 0.0
    %v1768 = vsel %vm1752, %v1679, 0.0
    %v1769 = vld [vmem:[#allocation7] sm:$0x1]
    %v1770 = vadd.f32 %v1753, %v1754
    %v1771 = vadd.f32 %v1770, %v1755
    %v1772 = vadd.f32 %v1771, %v1756
    %v1773 = vadd.f32 %v1772, %v1757
    %v1774 = vadd.f32 %v1773, %v1758
    %v1775 = vadd.f32 %v1774, %v1759
    %v1776 = vadd.f32 %v1775, %v1760
    %v1777 = vadd.f32 %v1776, %v1761
    %v1778 = vadd.f32 %v1777, %v1762
    %v1779 = vadd.f32 %v1778, %v1763
    %v1780 = vadd.f32 %v1779, %v1764
    %v1781 = vadd.f32 %v1780, %v1765
    %v1782 = vadd.f32 %v1781, %v1766
    %v1783 = vadd.f32 %v1782, %v1767
    %v1784 = vadd.f32 %v1783, %v1768
    %1785 = vadd.xlane.f32.xlu0 %v1784
    %v1786 = vpop.xlane.xlu0 %1785
    %v1787 = vrot.slane %v1786, 4
    %v1788 = vadd.f32 %v1786, %v1787
    %v1789 = vrot.slane %v1788, 2
    %v1790 = vadd.f32 %v1788, %v1789
    %v1791 = vrot.slane %v1790, 1
    %v1792 = vadd.f32 %v1790, %v1791
    %s1793 = vtos %v1792
    %v1794 = vstv %s1793
    %v1795 = vadd.f32 %v1769, %v1794
    %vm1796 = vcmask 0
    %1797 = vst.msk [vmem:[#allocation7] sm:$0x1] %vm1796, %v1795
    // Predicated region
    $region46: #{tpu_custom_call.1} parent=1 // pred_check
      _
    $region47: #{tpu_custom_call.1} parent=1 // pred_check_branch
      %1799 = sbr.rel (0) target = $region49
    $region48: #{tpu_custom_call.1} parent=1 // pred_region
      %s1801 = ssub.s32 16, 16
      %1802 = vsyncadd [#allocation4], %s1801
      %s1804 = sshll.u32 [#allocation7], 4
      %s1805 = int_to_ptr.vmem [resolvable:$true] %s1804
      %1807 = dma.vmem_to_hbm [thread:$0]  %s1805, 16, %s8, [#allocation4]
    $region49: #{tpu_custom_call.1} parent=1 // pred_fallthru
      _
    // Predicated region
    $region50: #{tpu_custom_call.1} parent=1 // pred_check
      _
    $region51: #{tpu_custom_call.1} parent=1 // pred_check_branch
      %1809 = sbr.rel (0) target = $region53
    $region52: #{tpu_custom_call.1} parent=1 // pred_region
      %1810 = dma.done [#allocation4], 16
    $region53: #{tpu_custom_call.1} parent=1 // pred_fallthru
      _
    %1811 = vsyncpa [#allocation3], 1
    %1812 = vsyncpa [#allocation6], 1
    %1813 = vsyncpa [#allocation4], 1

</llo_original>
